<compile_context>
chip_gen: v7x
topology: tpu7x:2x2x1
jax: 0.10.0
libtpu: 0.0.40
codegen_flags: <defaults>
</compile_context>

<pallas_src>
import jax
import jax.numpy as jnp
from jax import lax
from jax.experimental import pallas as pl
from jax.experimental.pallas import tpu as pltpu


def _make_cbam_kernel(C, H, W, off0):
    HW = H * W
    inv_c = 1.0 / float(C)

    def kernel(x_ref, w1_ref, b1_ref, w2_ref, b2_ref, widx_ref,
               wsp_ref, bsp_ref, o_ref, pad_ref):
        x = x_ref[0].astype(jnp.float32)                         # (C, HW)

        # ---- channel attention: GAP -> 1x1 conv -> relu -> 1x1 conv -> sigmoid
        s = jnp.mean(x, axis=1, keepdims=True)                   # (C, 1)  lane reduction
        h = jnp.dot(w1_ref[...], s,
                    preferred_element_type=jnp.float32) + b1_ref[...]     # (Cr, 1) MXU
        h = jnp.maximum(h, 0.0)
        cw = jnp.dot(w2_ref[...], h,
                     preferred_element_type=jnp.float32) + b2_ref[...]    # (C, 1) MXU
        cw = jax.nn.sigmoid(cw)

        out = x * cw                                             # (C, HW), free lane broadcast

        # ---- spatial attention maps: channel max / mean (sublane reductions)
        mx = jnp.max(out, axis=0, keepdims=True)                 # (1, HW)
        av = jnp.sum(out, axis=0, keepdims=True) * inv_c         # (1, HW)

        # zero-padded flat maps in VMEM scratch: row 0 = max-pool, row 1 = avg-pool
        pad_ref[...] = jnp.zeros_like(pad_ref)
        pad_ref[0:1, off0:off0 + HW] = mx
        pad_ref[1:2, off0:off0 + HW] = av

        wcol = widx_ref[...]                                     # (1, HW) int32, = p mod W

        # 7x7 cross-correlation (pad 3), 2 input channels.
        # flat index math: tap (ky, kx) at output p reads pad[off0 + p + (ky-3)*W + (kx-3)];
        # horizontally out-of-row taps are masked per kx.
        parts = []
        for kx in range(7):
            acc = None
            for ky in range(7):
                start = off0 + (ky - 3) * W + (kx - 3)
                term = (wsp_ref[ky * 7 + kx] * pad_ref[0:1, start:start + HW]
                        + wsp_ref[49 + ky * 7 + kx] * pad_ref[1:2, start:start + HW])
                acc = term if acc is None else acc + term
            valid = (wcol >= 3 - kx) & (wcol < W + 3 - kx)
            parts.append(jnp.where(valid, acc, 0.0))

        conv = (((parts[0] + parts[1]) + (parts[2] + parts[3]))
                + ((parts[4] + parts[5]) + (parts[6] + bsp_ref[0])))
        sw = jax.nn.sigmoid(conv)                                # (1, HW)

        # final write: lane-dense (C, HW) store, sw broadcasts over sublanes for free
        o_ref[0] = (out * sw).astype(o_ref.dtype)

    return kernel


def cbam_pallas(x_nchw, params):
    """x_nchw: (N, C, H, W) float32.  Returns (N, C, H, W)."""
    w1, b1, w2, b2, wsp, bsp = (params[k] for k in ("w1", "b1", "w2", "b2", "wsp", "bsp"))
    N, C, H, W = x_nchw.shape
    Cr = w1.shape[0]
    HW = H * W
    off0 = 3 * W + 3                                     # front zero margin (>= 3 rows + 3)
    L = ((off0 + HW + 3 * W + 3 + 127) // 128) * 128     # padded flat map length

    # glue (all free / tiny): NCHW -> (N, C, H*W) bitcast, bias columns, flat conv weights
    x_flat = x_nchw.reshape(N, C, HW)
    b1c = b1.reshape(Cr, 1)
    b2c = b2.reshape(C, 1)
    wsp_flat = wsp.reshape(2 * 49)                       # [in_ch, ky, kx] flattened
    bsp_1d = bsp.reshape(1)
    w_idx = (jnp.arange(HW, dtype=jnp.int32) % W).reshape(1, HW)

    blk = C * HW * 4
    needed = 6 * blk + 2 * L * 4 + (2 << 20)
    vmem_limit = int(min(96 * 1024 * 1024, max(needed, 32 * 1024 * 1024)))

    kernel = _make_cbam_kernel(C, H, W, off0)
    y_flat = pl.pallas_call(
        kernel,
        out_shape=jax.ShapeDtypeStruct((N, C, HW), x_nchw.dtype),
        grid=(N,),
        in_specs=[
            pl.BlockSpec((1, C, HW), lambda n: (n, 0, 0)),
            pl.BlockSpec((Cr, C), lambda n: (0, 0)),
            pl.BlockSpec((Cr, 1), lambda n: (0, 0)),
            pl.BlockSpec((C, Cr), lambda n: (0, 0)),
            pl.BlockSpec((C, 1), lambda n: (0, 0)),
            pl.BlockSpec((1, HW), lambda n: (0, 0)),
            pl.BlockSpec(memory_space=pltpu.MemorySpace.SMEM),
            pl.BlockSpec(memory_space=pltpu.MemorySpace.SMEM),
        ],
        out_specs=pl.BlockSpec((1, C, HW), lambda n: (n, 0, 0)),
        scratch_shapes=[pltpu.VMEM((2, L), jnp.float32)],
        compiler_params=pltpu.CompilerParams(
            dimension_semantics=("parallel",),
            vmem_limit_bytes=vmem_limit,
        ),
    )(x_flat, w1, b1c, w2, b2c, w_idx, wsp_flat, bsp_1d)

    return y_flat.reshape(N, C, H, W)


def cbam_reference(x, params):
    """Pure-JAX NCHW reference mirroring the PyTorch module."""
    w1, b1, w2, b2, wsp, bsp = (params[k] for k in ("w1", "b1", "w2", "b2", "wsp", "bsp"))
    pooled = jnp.mean(x, axis=(2, 3))                            # (N, C)
    h = jax.nn.relu(pooled @ w1.T + b1)                          # (N, Cr)
    cw = jax.nn.sigmoid(h @ w2.T + b2)                           # (N, C)
    out = x * cw[:, :, None, None]
    mx = jnp.max(out, axis=1, keepdims=True)
    av = jnp.mean(out, axis=1, keepdims=True)
    cat = jnp.concatenate([mx, av], axis=1)                      # (N, 2, H, W)
    conv = lax.conv_general_dilated(
        cat, wsp, window_strides=(1, 1), padding=((3, 3), (3, 3)),
        dimension_numbers=("NCHW", "OIHW", "NCHW"))
    sw = jax.nn.sigmoid(conv + bsp[None, :, None, None])
    return out * sw


def init_params(key, in_channels, reduction=16):
    cr = in_channels // reduction
    ks = jax.random.split(key, 6)
    return {
        "w1": 0.2 * jax.random.normal(ks[0], (cr, in_channels), jnp.float32),
        "b1": 0.1 * jax.random.normal(ks[1], (cr,), jnp.float32),
        "w2": 0.2 * jax.random.normal(ks[2], (in_channels, cr), jnp.float32),
        "b2": 0.1 * jax.random.normal(ks[3], (in_channels,), jnp.float32),
        "wsp": 0.1 * jax.random.normal(ks[4], (1, 2, 7, 7), jnp.float32),
        "bsp": 0.1 * jax.random.normal(ks[5], (1,), jnp.float32),
    }


if __name__ == "__main__":
    N, C, H, W = 2, 128, 16, 16      # reduction=16 -> hidden channels = 8
    key = jax.random.PRNGKey(0)
    kx_, kp = jax.random.split(key)
    x = jax.random.normal(kx_, (N, C, H, W), jnp.float32)
    params = init_params(kp, C, reduction=16)

    cbam_jit = jax.jit(cbam_pallas)
    y = jax.block_until_ready(cbam_jit(x, params))

    y_ref = cbam_reference(x, params)
    assert y.shape == (N, C, H, W)
    max_err = float(jnp.max(jnp.abs(y - y_ref)))
    # small tolerance headroom: in-kernel MXU matmuls vs XLA matmul/conv precision
    assert jnp.allclose(y, y_ref, atol=1e-3, rtol=1e-3), max_err
    print("KERNEL_OK")
</pallas_src>

<mosaic_0001>
module attributes {stable_mosaic.version = 11 : i64} {
  func.func @kernel(%arg0: i32, %arg1: memref<1x128x256xf32, #tpu.memory_space<vmem>>, %arg2: memref<8x128xf32, #tpu.memory_space<vmem>>, %arg3: memref<8x1xf32, #tpu.memory_space<vmem>>, %arg4: memref<128x8xf32, #tpu.memory_space<vmem>>, %arg5: memref<128x1xf32, #tpu.memory_space<vmem>>, %arg6: memref<1x256xi32, #tpu.memory_space<vmem>>, %arg7: memref<98xf32, #tpu.memory_space<smem>>, %arg8: memref<1xf32, #tpu.memory_space<smem>>, %arg9: memref<1x128x256xf32, #tpu.memory_space<vmem>>, %arg10: memref<2x384xf32, #tpu.memory_space<vmem>>) attributes {dimension_semantics = [#tpu.dimension_semantics<parallel>], iteration_bounds = array<i64: 2>, scalar_prefetch = 0 : i64, scratch_operands = 1 : i64, tpu.core_type = #tpu.core_type<tc>, window_params = [{transform_indices = @transform_0, window_bounds = array<i64: 1, 128, 256>}, {pipeline_mode = #tpu.pipeline_mode<synchronous>, transform_indices = @transform_1, window_bounds = array<i64: 8, 128>}, {pipeline_mode = #tpu.pipeline_mode<synchronous>, transform_indices = @transform_2, window_bounds = array<i64: 8, 1>}, {pipeline_mode = #tpu.pipeline_mode<synchronous>, transform_indices = @transform_3, window_bounds = array<i64: 128, 8>}, {pipeline_mode = #tpu.pipeline_mode<synchronous>, transform_indices = @transform_4, window_bounds = array<i64: 128, 1>}, {pipeline_mode = #tpu.pipeline_mode<synchronous>, transform_indices = @transform_5, window_bounds = array<i64: 1, 256>}, {transform_indices = @transform_6, window_bounds = array<i64: 98>}, {transform_indices = @transform_7, window_bounds = array<i64: 1>}, {transform_indices = @transform_8, window_bounds = array<i64: 1, 128, 256>}]} {
    %c0 = arith.constant 0 : index
    %c0_0 = arith.constant 0 : index
    %c0_1 = arith.constant 0 : index
    %0 = vector.load %arg1[%c0, %c0_0, %c0_1] : memref<1x128x256xf32, #tpu.memory_space<vmem>>, vector<1x128x256xf32>
    %1 = vector.shape_cast %0 : vector<1x128x256xf32> to vector<128x256xf32>
    %cst = arith.constant dense<0.000000e+00> : vector<128xf32>
    %2 = vector.multi_reduction <add>, %1, %cst [1] : vector<128x256xf32> to vector<128xf32>
    %3 = vector.shape_cast %2 : vector<128xf32> to vector<128x1xf32>
    %cst_2 = arith.constant 2.560000e+02 : f32
    %4 = vector.broadcast %cst_2 : f32 to vector<128x1xf32>
    %5 = arith.divf %3, %4 : vector<128x1xf32>
    %c0_3 = arith.constant 0 : index
    %c0_4 = arith.constant 0 : index
    %6 = vector.load %arg2[%c0_3, %c0_4] : memref<8x128xf32, #tpu.memory_space<vmem>>, vector<8x128xf32>
    %cst_5 = arith.constant dense<0.000000e+00> : vector<8x1xf32>
    %7 = tpu.matmul %6, %5, %cst_5 {dimension_numbers = #tpu.dot_dimension_numbers<[1], [0], [0], [1], [0, 0, 1, 1], [], []>} : vector<8x128xf32>, vector<128x1xf32>, vector<8x1xf32> -> vector<8x1xf32>
    %c0_6 = arith.constant 0 : index
    %c0_7 = arith.constant 0 : index
    %8 = vector.load %arg3[%c0_6, %c0_7] : memref<8x1xf32, #tpu.memory_space<vmem>>, vector<8x1xf32>
    %9 = arith.addf %7, %8 : vector<8x1xf32>
    %cst_8 = arith.constant 0.000000e+00 : f32
    %10 = vector.broadcast %cst_8 : f32 to vector<8x1xf32>
    %11 = arith.maximumf %9, %10 : vector<8x1xf32>
    %c0_9 = arith.constant 0 : index
    %c0_10 = arith.constant 0 : index
    %12 = vector.load %arg4[%c0_9, %c0_10] : memref<128x8xf32, #tpu.memory_space<vmem>>, vector<128x8xf32>
    %cst_11 = arith.constant dense<0.000000e+00> : vector<128x1xf32>
    %13 = tpu.matmul %12, %11, %cst_11 {dimension_numbers = #tpu.dot_dimension_numbers<[1], [0], [0], [1], [0, 0, 1, 1], [], []>} : vector<128x8xf32>, vector<8x1xf32>, vector<128x1xf32> -> vector<128x1xf32>
    %c0_12 = arith.constant 0 : index
    %c0_13 = arith.constant 0 : index
    %14 = vector.load %arg5[%c0_12, %c0_13] : memref<128x1xf32, #tpu.memory_space<vmem>>, vector<128x1xf32>
    %15 = arith.addf %13, %14 : vector<128x1xf32>
    %16 = arith.negf %15 : vector<128x1xf32>
    %17 = math.exp %16 : vector<128x1xf32>
    %cst_14 = arith.constant 1.000000e+00 : f32
    %18 = vector.broadcast %cst_14 : f32 to vector<128x1xf32>
    %19 = arith.addf %18, %17 : vector<128x1xf32>
    %20 = arith.divf %18, %19 : vector<128x1xf32>
    %21 = vector.broadcast %20 : vector<128x1xf32> to vector<128x256xf32>
    %22 = arith.mulf %1, %21 : vector<128x256xf32>
    %cst_15 = arith.constant dense<0xFF800000> : vector<256xf32>
    %23 = vector.multi_reduction <maximumf>, %22, %cst_15 [0] : vector<128x256xf32> to vector<256xf32>
    %24 = vector.shape_cast %23 : vector<256xf32> to vector<1x256xf32>
    %cst_16 = arith.constant dense<0.000000e+00> : vector<256xf32>
    %25 = vector.multi_reduction <add>, %22, %cst_16 [0] : vector<128x256xf32> to vector<256xf32>
    %26 = vector.shape_cast %25 : vector<256xf32> to vector<1x256xf32>
    %cst_17 = arith.constant 7.812500e-03 : f32
    %27 = vector.broadcast %cst_17 : f32 to vector<1x256xf32>
    %28 = arith.mulf %26, %27 : vector<1x256xf32>
    %cst_18 = arith.constant 0.000000e+00 : f32
    %29 = vector.broadcast %cst_18 : f32 to vector<2x384xf32>
    %c0_19 = arith.constant 0 : index
    %c0_20 = arith.constant 0 : index
    %30 = vector.load %arg10[%c0_19, %c0_20] : memref<2x384xf32, #tpu.memory_space<vmem>>, vector<2x384xf32>
    tpu.vector_store %arg10[%c0_19, %c0_20], %29 {strides = array<i32>} : memref<2x384xf32, #tpu.memory_space<vmem>>, vector<2x384xf32>,
    %c0_21 = arith.constant 0 : index
    %c51 = arith.constant 51 : index
    %31 = vector.load %arg10[%c0_21, %c51] : memref<2x384xf32, #tpu.memory_space<vmem>>, vector<1x256xf32>
    tpu.vector_store %arg10[%c0_21, %c51], %24 {strides = array<i32>} : memref<2x384xf32, #tpu.memory_space<vmem>>, vector<1x256xf32>,
    %c1 = arith.constant 1 : index
    %c51_22 = arith.constant 51 : index
    %32 = vector.load %arg10[%c1, %c51_22] : memref<2x384xf32, #tpu.memory_space<vmem>>, vector<1x256xf32>
    tpu.vector_store %arg10[%c1, %c51_22], %28 {strides = array<i32>} : memref<2x384xf32, #tpu.memory_space<vmem>>, vector<1x256xf32>,
    %c0_23 = arith.constant 0 : index
    %c0_24 = arith.constant 0 : index
    %33 = vector.load %arg6[%c0_23, %c0_24] : memref<1x256xi32, #tpu.memory_space<vmem>>, vector<1x256xi32>
    %c0_25 = arith.constant 0 : index
    %34 = memref.load %arg7[%c0_25] : memref<98xf32, #tpu.memory_space<smem>>
    %c0_26 = arith.constant 0 : index
    %c0_27 = arith.constant 0 : index
    %35 = vector.load %arg10[%c0_26, %c0_27] : memref<2x384xf32, #tpu.memory_space<vmem>>, vector<1x256xf32>
    %36 = vector.broadcast %34 : f32 to vector<1x256xf32>
    %37 = arith.mulf %36, %35 : vector<1x256xf32>
    %c49 = arith.constant 49 : index
    %38 = memref.load %arg7[%c49] : memref<98xf32, #tpu.memory_space<smem>>
    %c1_28 = arith.constant 1 : index
    %c0_29 = arith.constant 0 : index
    %39 = vector.load %arg10[%c1_28, %c0_29] : memref<2x384xf32, #tpu.memory_space<vmem>>, vector<1x256xf32>
    %40 = vector.broadcast %38 : f32 to vector<1x256xf32>
    %41 = arith.mulf %40, %39 : vector<1x256xf32>
    %42 = arith.addf %37, %41 : vector<1x256xf32>
    %c7 = arith.constant 7 : index
    %43 = memref.load %arg7[%c7] : memref<98xf32, #tpu.memory_space<smem>>
    %c0_30 = arith.constant 0 : index
    %c16 = arith.constant 16 : index
    %44 = vector.load %arg10[%c0_30, %c16] : memref<2x384xf32, #tpu.memory_space<vmem>>, vector<1x256xf32>
    %45 = vector.broadcast %43 : f32 to vector<1x256xf32>
    %46 = arith.mulf %45, %44 : vector<1x256xf32>
    %c56 = arith.constant 56 : index
    %47 = memref.load %arg7[%c56] : memref<98xf32, #tpu.memory_space<smem>>
    %c1_31 = arith.constant 1 : index
    %c16_32 = arith.constant 16 : index
    %48 = vector.load %arg10[%c1_31, %c16_32] : memref<2x384xf32, #tpu.memory_space<vmem>>, vector<1x256xf32>
    %49 = vector.broadcast %47 : f32 to vector<1x256xf32>
    %50 = arith.mulf %49, %48 : vector<1x256xf32>
    %51 = arith.addf %46, %50 : vector<1x256xf32>
    %52 = arith.addf %42, %51 : vector<1x256xf32>
    %c14 = arith.constant 14 : index
    %53 = memref.load %arg7[%c14] : memref<98xf32, #tpu.memory_space<smem>>
    %c0_33 = arith.constant 0 : index
    %c32 = arith.constant 32 : index
    %54 = vector.load %arg10[%c0_33, %c32] : memref<2x384xf32, #tpu.memory_space<vmem>>, vector<1x256xf32>
    %55 = vector.broadcast %53 : f32 to vector<1x256xf32>
    %56 = arith.mulf %55, %54 : vector<1x256xf32>
    %c63 = arith.constant 63 : index
    %57 = memref.load %arg7[%c63] : memref<98xf32, #tpu.memory_space<smem>>
    %c1_34 = arith.constant 1 : index
    %c32_35 = arith.constant 32 : index
    %58 = vector.load %arg10[%c1_34, %c32_35] : memref<2x384xf32, #tpu.memory_space<vmem>>, vector<1x256xf32>
    %59 = vector.broadcast %57 : f32 to vector<1x256xf32>
    %60 = arith.mulf %59, %58 : vector<1x256xf32>
    %61 = arith.addf %56, %60 : vector<1x256xf32>
    %62 = arith.addf %52, %61 : vector<1x256xf32>
    %c21 = arith.constant 21 : index
    %63 = memref.load %arg7[%c21] : memref<98xf32, #tpu.memory_space<smem>>
    %c0_36 = arith.constant 0 : index
    %c48 = arith.constant 48 : index
    %64 = vector.load %arg10[%c0_36, %c48] : memref<2x384xf32, #tpu.memory_space<vmem>>, vector<1x256xf32>
    %65 = vector.broadcast %63 : f32 to vector<1x256xf32>
    %66 = arith.mulf %65, %64 : vector<1x256xf32>
    %c70 = arith.constant 70 : index
    %67 = memref.load %arg7[%c70] : memref<98xf32, #tpu.memory_space<smem>>
    %c1_37 = arith.constant 1 : index
    %c48_38 = arith.constant 48 : index
    %68 = vector.load %arg10[%c1_37, %c48_38] : memref<2x384xf32, #tpu.memory_space<vmem>>, vector<1x256xf32>
    %69 = vector.broadcast %67 : f32 to vector<1x256xf32>
    %70 = arith.mulf %69, %68 : vector<1x256xf32>
    %71 = arith.addf %66, %70 : vector<1x256xf32>
    %72 = arith.addf %62, %71 : vector<1x256xf32>
    %c28 = arith.constant 28 : index
    %73 = memref.load %arg7[%c28] : memref<98xf32, #tpu.memory_space<smem>>
    %c0_39 = arith.constant 0 : index
    %c64 = arith.constant 64 : index
    %74 = vector.load %arg10[%c0_39, %c64] : memref<2x384xf32, #tpu.memory_space<vmem>>, vector<1x256xf32>
    %75 = vector.broadcast %73 : f32 to vector<1x256xf32>
    %76 = arith.mulf %75, %74 : vector<1x256xf32>
    %c77 = arith.constant 77 : index
    %77 = memref.load %arg7[%c77] : memref<98xf32, #tpu.memory_space<smem>>
    %c1_40 = arith.constant 1 : index
    %c64_41 = arith.constant 64 : index
    %78 = vector.load %arg10[%c1_40, %c64_41] : memref<2x384xf32, #tpu.memory_space<vmem>>, vector<1x256xf32>
    %79 = vector.broadcast %77 : f32 to vector<1x256xf32>
    %80 = arith.mulf %79, %78 : vector<1x256xf32>
    %81 = arith.addf %76, %80 : vector<1x256xf32>
    %82 = arith.addf %72, %81 : vector<1x256xf32>
    %c35 = arith.constant 35 : index
    %83 = memref.load %arg7[%c35] : memref<98xf32, #tpu.memory_space<smem>>
    %c0_42 = arith.constant 0 : index
    %c80 = arith.constant 80 : index
    %84 = vector.load %arg10[%c0_42, %c80] : memref<2x384xf32, #tpu.memory_space<vmem>>, vector<1x256xf32>
    %85 = vector.broadcast %83 : f32 to vector<1x256xf32>
    %86 = arith.mulf %85, %84 : vector<1x256xf32>
    %c84 = arith.constant 84 : index
    %87 = memref.load %arg7[%c84] : memref<98xf32, #tpu.memory_space<smem>>
    %c1_43 = arith.constant 1 : index
    %c80_44 = arith.constant 80 : index
    %88 = vector.load %arg10[%c1_43, %c80_44] : memref<2x384xf32, #tpu.memory_space<vmem>>, vector<1x256xf32>
    %89 = vector.broadcast %87 : f32 to vector<1x256xf32>
    %90 = arith.mulf %89, %88 : vector<1x256xf32>
    %91 = arith.addf %86, %90 : vector<1x256xf32>
    %92 = arith.addf %82, %91 : vector<1x256xf32>
    %c42 = arith.constant 42 : index
    %93 = memref.load %arg7[%c42] : memref<98xf32, #tpu.memory_space<smem>>
    %c0_45 = arith.constant 0 : index
    %c96 = arith.constant 96 : index
    %94 = vector.load %arg10[%c0_45, %c96] : memref<2x384xf32, #tpu.memory_space<vmem>>, vector<1x256xf32>
    %95 = vector.broadcast %93 : f32 to vector<1x256xf32>
    %96 = arith.mulf %95, %94 : vector<1x256xf32>
    %c91 = arith.constant 91 : index
    %97 = memref.load %arg7[%c91] : memref<98xf32, #tpu.memory_space<smem>>
    %c1_46 = arith.constant 1 : index
    %c96_47 = arith.constant 96 : index
    %98 = vector.load %arg10[%c1_46, %c96_47] : memref<2x384xf32, #tpu.memory_space<vmem>>, vector<1x256xf32>
    %99 = vector.broadcast %97 : f32 to vector<1x256xf32>
    %100 = arith.mulf %99, %98 : vector<1x256xf32>
    %101 = arith.addf %96, %100 : vector<1x256xf32>
    %102 = arith.addf %92, %101 : vector<1x256xf32>
    %c3_i32 = arith.constant 3 : i32
    %103 = vector.broadcast %c3_i32 : i32 to vector<1x256xi32>
    %104 = arith.cmpi sge, %33, %103 : vector<1x256xi32>
    %c19_i32 = arith.constant 19 : i32
    %105 = vector.broadcast %c19_i32 : i32 to vector<1x256xi32>
    %106 = arith.cmpi slt, %33, %105 : vector<1x256xi32>
    %107 = arith.andi %104, %106 : vector<1x256xi1>
    %cst_48 = arith.constant 0.000000e+00 : f32
    %108 = vector.broadcast %cst_48 : f32 to vector<1x256xf32>
    %109 = arith.select %107, %102, %108 : vector<1x256xi1>, vector<1x256xf32>
    %c1_49 = arith.constant 1 : index
    %110 = memref.load %arg7[%c1_49] : memref<98xf32, #tpu.memory_space<smem>>
    %c0_50 = arith.constant 0 : index
    %c1_51 = arith.constant 1 : index
    %111 = vector.load %arg10[%c0_50, %c1_51] : memref<2x384xf32, #tpu.memory_space<vmem>>, vector<1x256xf32>
    %112 = vector.broadcast %110 : f32 to vector<1x256xf32>
    %113 = arith.mulf %112, %111 : vector<1x256xf32>
    %c50 = arith.constant 50 : index
    %114 = memref.load %arg7[%c50] : memref<98xf32, #tpu.memory_space<smem>>
    %c1_52 = arith.constant 1 : index
    %c1_53 = arith.constant 1 : index
    %115 = vector.load %arg10[%c1_52, %c1_53] : memref<2x384xf32, #tpu.memory_space<vmem>>, vector<1x256xf32>
    %116 = vector.broadcast %114 : f32 to vector<1x256xf32>
    %117 = arith.mulf %116, %115 : vector<1x256xf32>
    %118 = arith.addf %113, %117 : vector<1x256xf32>
    %c8 = arith.constant 8 : index
    %119 = memref.load %arg7[%c8] : memref<98xf32, #tpu.memory_space<smem>>
    %c0_54 = arith.constant 0 : index
    %c17 = arith.constant 17 : index
    %120 = vector.load %arg10[%c0_54, %c17] : memref<2x384xf32, #tpu.memory_space<vmem>>, vector<1x256xf32>
    %121 = vector.broadcast %119 : f32 to vector<1x256xf32>
    %122 = arith.mulf %121, %120 : vector<1x256xf32>
    %c57 = arith.constant 57 : index
    %123 = memref.load %arg7[%c57] : memref<98xf32, #tpu.memory_space<smem>>
    %c1_55 = arith.constant 1 : index
    %c17_56 = arith.constant 17 : index
    %124 = vector.load %arg10[%c1_55, %c17_56] : memref<2x384xf32, #tpu.memory_space<vmem>>, vector<1x256xf32>
    %125 = vector.broadcast %123 : f32 to vector<1x256xf32>
    %126 = arith.mulf %125, %124 : vector<1x256xf32>
    %127 = arith.addf %122, %126 : vector<1x256xf32>
    %128 = arith.addf %118, %127 : vector<1x256xf32>
    %c15 = arith.constant 15 : index
    %129 = memref.load %arg7[%c15] : memref<98xf32, #tpu.memory_space<smem>>
    %c0_57 = arith.constant 0 : index
    %c33 = arith.constant 33 : index
    %130 = vector.load %arg10[%c0_57, %c33] : memref<2x384xf32, #tpu.memory_space<vmem>>, vector<1x256xf32>
    %131 = vector.broadcast %129 : f32 to vector<1x256xf32>
    %132 = arith.mulf %131, %130 : vector<1x256xf32>
    %c64_58 = arith.constant 64 : index
    %133 = memref.load %arg7[%c64_58] : memref<98xf32, #tpu.memory_space<smem>>
    %c1_59 = arith.constant 1 : index
    %c33_60 = arith.constant 33 : index
    %134 = vector.load %arg10[%c1_59, %c33_60] : memref<2x384xf32, #tpu.memory_space<vmem>>, vector<1x256xf32>
    %135 = vector.broadcast %133 : f32 to vector<1x256xf32>
    %136 = arith.mulf %135, %134 : vector<1x256xf32>
    %137 = arith.addf %132, %136 : vector<1x256xf32>
    %138 = arith.addf %128, %137 : vector<1x256xf32>
    %c22 = arith.constant 22 : index
    %139 = memref.load %arg7[%c22] : memref<98xf32, #tpu.memory_space<smem>>
    %c0_61 = arith.constant 0 : index
    %c49_62 = arith.constant 49 : index
    %140 = vector.load %arg10[%c0_61, %c49_62] : memref<2x384xf32, #tpu.memory_space<vmem>>, vector<1x256xf32>
    %141 = vector.broadcast %139 : f32 to vector<1x256xf32>
    %142 = arith.mulf %141, %140 : vector<1x256xf32>
    %c71 = arith.constant 71 : index
    %143 = memref.load %arg7[%c71] : memref<98xf32, #tpu.memory_space<smem>>
    %c1_63 = arith.constant 1 : index
    %c49_64 = arith.constant 49 : index
    %144 = vector.load %arg10[%c1_63, %c49_64] : memref<2x384xf32, #tpu.memory_space<vmem>>, vector<1x256xf32>
    %145 = vector.broadcast %143 : f32 to vector<1x256xf32>
    %146 = arith.mulf %145, %144 : vector<1x256xf32>
    %147 = arith.addf %142, %146 : vector<1x256xf32>
    %148 = arith.addf %138, %147 : vector<1x256xf32>
    %c29 = arith.constant 29 : index
    %149 = memref.load %arg7[%c29] : memref<98xf32, #tpu.memory_space<smem>>
    %c0_65 = arith.constant 0 : index
    %c65 = arith.constant 65 : index
    %150 = vector.load %arg10[%c0_65, %c65] : memref<2x384xf32, #tpu.memory_space<vmem>>, vector<1x256xf32>
    %151 = vector.broadcast %149 : f32 to vector<1x256xf32>
    %152 = arith.mulf %151, %150 : vector<1x256xf32>
    %c78 = arith.constant 78 : index
    %153 = memref.load %arg7[%c78] : memref<98xf32, #tpu.memory_space<smem>>
    %c1_66 = arith.constant 1 : index
    %c65_67 = arith.constant 65 : index
    %154 = vector.load %arg10[%c1_66, %c65_67] : memref<2x384xf32, #tpu.memory_space<vmem>>, vector<1x256xf32>
    %155 = vector.broadcast %153 : f32 to vector<1x256xf32>
    %156 = arith.mulf %155, %154 : vector<1x256xf32>
    %157 = arith.addf %152, %156 : vector<1x256xf32>
    %158 = arith.addf %148, %157 : vector<1x256xf32>
    %c36 = arith.constant 36 : index
    %159 = memref.load %arg7[%c36] : memref<98xf32, #tpu.memory_space<smem>>
    %c0_68 = arith.constant 0 : index
    %c81 = arith.constant 81 : index
    %160 = vector.load %arg10[%c0_68, %c81] : memref<2x384xf32, #tpu.memory_space<vmem>>, vector<1x256xf32>
    %161 = vector.broadcast %159 : f32 to vector<1x256xf32>
    %162 = arith.mulf %161, %160 : vector<1x256xf32>
    %c85 = arith.constant 85 : index
    %163 = memref.load %arg7[%c85] : memref<98xf32, #tpu.memory_space<smem>>
    %c1_69 = arith.constant 1 : index
    %c81_70 = arith.constant 81 : index
    %164 = vector.load %arg10[%c1_69, %c81_70] : memref<2x384xf32, #tpu.memory_space<vmem>>, vector<1x256xf32>
    %165 = vector.broadcast %163 : f32 to vector<1x256xf32>
    %166 = arith.mulf %165, %164 : vector<1x256xf32>
    %167 = arith.addf %162, %166 : vector<1x256xf32>
    %168 = arith.addf %158, %167 : vector<1x256xf32>
    %c43 = arith.constant 43 : index
    %169 = memref.load %arg7[%c43] : memref<98xf32, #tpu.memory_space<smem>>
    %c0_71 = arith.constant 0 : index
    %c97 = arith.constant 97 : index
    %170 = vector.load %arg10[%c0_71, %c97] : memref<2x384xf32, #tpu.memory_space<vmem>>, vector<1x256xf32>
    %171 = vector.broadcast %169 : f32 to vector<1x256xf32>
    %172 = arith.mulf %171, %170 : vector<1x256xf32>
    %c92 = arith.constant 92 : index
    %173 = memref.load %arg7[%c92] : memref<98xf32, #tpu.memory_space<smem>>
    %c1_72 = arith.constant 1 : index
    %c97_73 = arith.constant 97 : index
    %174 = vector.load %arg10[%c1_72, %c97_73] : memref<2x384xf32, #tpu.memory_space<vmem>>, vector<1x256xf32>
    %175 = vector.broadcast %173 : f32 to vector<1x256xf32>
    %176 = arith.mulf %175, %174 : vector<1x256xf32>
    %177 = arith.addf %172, %176 : vector<1x256xf32>
    %178 = arith.addf %168, %177 : vector<1x256xf32>
    %c2_i32 = arith.constant 2 : i32
    %179 = vector.broadcast %c2_i32 : i32 to vector<1x256xi32>
    %180 = arith.cmpi sge, %33, %179 : vector<1x256xi32>
    %c18_i32 = arith.constant 18 : i32
    %181 = vector.broadcast %c18_i32 : i32 to vector<1x256xi32>
    %182 = arith.cmpi slt, %33, %181 : vector<1x256xi32>
    %183 = arith.andi %180, %182 : vector<1x256xi1>
    %cst_74 = arith.constant 0.000000e+00 : f32
    %184 = vector.broadcast %cst_74 : f32 to vector<1x256xf32>
    %185 = arith.select %183, %178, %184 : vector<1x256xi1>, vector<1x256xf32>
    %c2 = arith.constant 2 : index
    %186 = memref.load %arg7[%c2] : memref<98xf32, #tpu.memory_space<smem>>
    %c0_75 = arith.constant 0 : index
    %c2_76 = arith.constant 2 : index
    %187 = vector.load %arg10[%c0_75, %c2_76] : memref<2x384xf32, #tpu.memory_space<vmem>>, vector<1x256xf32>
    %188 = vector.broadcast %186 : f32 to vector<1x256xf32>
    %189 = arith.mulf %188, %187 : vector<1x256xf32>
    %c51_77 = arith.constant 51 : index
    %190 = memref.load %arg7[%c51_77] : memref<98xf32, #tpu.memory_space<smem>>
    %c1_78 = arith.constant 1 : index
    %c2_79 = arith.constant 2 : index
    %191 = vector.load %arg10[%c1_78, %c2_79] : memref<2x384xf32, #tpu.memory_space<vmem>>, vector<1x256xf32>
    %192 = vector.broadcast %190 : f32 to vector<1x256xf32>
    %193 = arith.mulf %192, %191 : vector<1x256xf32>
    %194 = arith.addf %189, %193 : vector<1x256xf32>
    %c9 = arith.constant 9 : index
    %195 = memref.load %arg7[%c9] : memref<98xf32, #tpu.memory_space<smem>>
    %c0_80 = arith.constant 0 : index
    %c18 = arith.constant 18 : index
    %196 = vector.load %arg10[%c0_80, %c18] : memref<2x384xf32, #tpu.memory_space<vmem>>, vector<1x256xf32>
    %197 = vector.broadcast %195 : f32 to vector<1x256xf32>
    %198 = arith.mulf %197, %196 : vector<1x256xf32>
    %c58 = arith.constant 58 : index
    %199 = memref.load %arg7[%c58] : memref<98xf32, #tpu.memory_space<smem>>
    %c1_81 = arith.constant 1 : index
    %c18_82 = arith.constant 18 : index
    %200 = vector.load %arg10[%c1_81, %c18_82] : memref<2x384xf32, #tpu.memory_space<vmem>>, vector<1x256xf32>
    %201 = vector.broadcast %199 : f32 to vector<1x256xf32>
    %202 = arith.mulf %201, %200 : vector<1x256xf32>
    %203 = arith.addf %198, %202 : vector<1x256xf32>
    %204 = arith.addf %194, %203 : vector<1x256xf32>
    %c16_83 = arith.constant 16 : index
    %205 = memref.load %arg7[%c16_83] : memref<98xf32, #tpu.memory_space<smem>>
    %c0_84 = arith.constant 0 : index
    %c34 = arith.constant 34 : index
    %206 = vector.load %arg10[%c0_84, %c34] : memref<2x384xf32, #tpu.memory_space<vmem>>, vector<1x256xf32>
    %207 = vector.broadcast %205 : f32 to vector<1x256xf32>
    %208 = arith.mulf %207, %206 : vector<1x256xf32>
    %c65_85 = arith.constant 65 : index
    %209 = memref.load %arg7[%c65_85] : memref<98xf32, #tpu.memory_space<smem>>
    %c1_86 = arith.constant 1 : index
    %c34_87 = arith.constant 34 : index
    %210 = vector.load %arg10[%c1_86, %c34_87] : memref<2x384xf32, #tpu.memory_space<vmem>>, vector<1x256xf32>
    %211 = vector.broadcast %209 : f32 to vector<1x256xf32>
    %212 = arith.mulf %211, %210 : vector<1x256xf32>
    %213 = arith.addf %208, %212 : vector<1x256xf32>
    %214 = arith.addf %204, %213 : vector<1x256xf32>
    %c23 = arith.constant 23 : index
    %215 = memref.load %arg7[%c23] : memref<98xf32, #tpu.memory_space<smem>>
    %c0_88 = arith.constant 0 : index
    %c50_89 = arith.constant 50 : index
    %216 = vector.load %arg10[%c0_88, %c50_89] : memref<2x384xf32, #tpu.memory_space<vmem>>, vector<1x256xf32>
    %217 = vector.broadcast %215 : f32 to vector<1x256xf32>
    %218 = arith.mulf %217, %216 : vector<1x256xf32>
    %c72 = arith.constant 72 : index
    %219 = memref.load %arg7[%c72] : memref<98xf32, #tpu.memory_space<smem>>
    %c1_90 = arith.constant 1 : index
    %c50_91 = arith.constant 50 : index
    %220 = vector.load %arg10[%c1_90, %c50_91] : memref<2x384xf32, #tpu.memory_space<vmem>>, vector<1x256xf32>
    %221 = vector.broadcast %219 : f32 to vector<1x256xf32>
    %222 = arith.mulf %221, %220 : vector<1x256xf32>
    %223 = arith.addf %218, %222 : vector<1x256xf32>
    %224 = arith.addf %214, %223 : vector<1x256xf32>
    %c30 = arith.constant 30 : index
    %225 = memref.load %arg7[%c30] : memref<98xf32, #tpu.memory_space<smem>>
    %c0_92 = arith.constant 0 : index
    %c66 = arith.constant 66 : index
    %226 = vector.load %arg10[%c0_92, %c66] : memref<2x384xf32, #tpu.memory_space<vmem>>, vector<1x256xf32>
    %227 = vector.broadcast %225 : f32 to vector<1x256xf32>
    %228 = arith.mulf %227, %226 : vector<1x256xf32>
    %c79 = arith.constant 79 : index
    %229 = memref.load %arg7[%c79] : memref<98xf32, #tpu.memory_space<smem>>
    %c1_93 = arith.constant 1 : index
    %c66_94 = arith.constant 66 : index
    %230 = vector.load %arg10[%c1_93, %c66_94] : memref<2x384xf32, #tpu.memory_space<vmem>>, vector<1x256xf32>
    %231 = vector.broadcast %229 : f32 to vector<1x256xf32>
    %232 = arith.mulf %231, %230 : vector<1x256xf32>
    %233 = arith.addf %228, %232 : vector<1x256xf32>
    %234 = arith.addf %224, %233 : vector<1x256xf32>
    %c37 = arith.constant 37 : index
    %235 = memref.load %arg7[%c37] : memref<98xf32, #tpu.memory_space<smem>>
    %c0_95 = arith.constant 0 : index
    %c82 = arith.constant 82 : index
    %236 = vector.load %arg10[%c0_95, %c82] : memref<2x384xf32, #tpu.memory_space<vmem>>, vector<1x256xf32>
    %237 = vector.broadcast %235 : f32 to vector<1x256xf32>
    %238 = arith.mulf %237, %236 : vector<1x256xf32>
    %c86 = arith.constant 86 : index
    %239 = memref.load %arg7[%c86] : memref<98xf32, #tpu.memory_space<smem>>
    %c1_96 = arith.constant 1 : index
    %c82_97 = arith.constant 82 : index
    %240 = vector.load %arg10[%c1_96, %c82_97] : memref<2x384xf32, #tpu.memory_space<vmem>>, vector<1x256xf32>
    %241 = vector.broadcast %239 : f32 to vector<1x256xf32>
    %242 = arith.mulf %241, %240 : vector<1x256xf32>
    %243 = arith.addf %238, %242 : vector<1x256xf32>
    %244 = arith.addf %234, %243 : vector<1x256xf32>
    %c44 = arith.constant 44 : index
    %245 = memref.load %arg7[%c44] : memref<98xf32, #tpu.memory_space<smem>>
    %c0_98 = arith.constant 0 : index
    %c98 = arith.constant 98 : index
    %246 = vector.load %arg10[%c0_98, %c98] : memref<2x384xf32, #tpu.memory_space<vmem>>, vector<1x256xf32>
    %247 = vector.broadcast %245 : f32 to vector<1x256xf32>
    %248 = arith.mulf %247, %246 : vector<1x256xf32>
    %c93 = arith.constant 93 : index
    %249 = memref.load %arg7[%c93] : memref<98xf32, #tpu.memory_space<smem>>
    %c1_99 = arith.constant 1 : index
    %c98_100 = arith.constant 98 : index
    %250 = vector.load %arg10[%c1_99, %c98_100] : memref<2x384xf32, #tpu.memory_space<vmem>>, vector<1x256xf32>
    %251 = vector.broadcast %249 : f32 to vector<1x256xf32>
    %252 = arith.mulf %251, %250 : vector<1x256xf32>
    %253 = arith.addf %248, %252 : vector<1x256xf32>
    %254 = arith.addf %244, %253 : vector<1x256xf32>
    %c1_i32 = arith.constant 1 : i32
    %255 = vector.broadcast %c1_i32 : i32 to vector<1x256xi32>
    %256 = arith.cmpi sge, %33, %255 : vector<1x256xi32>
    %c17_i32 = arith.constant 17 : i32
    %257 = vector.broadcast %c17_i32 : i32 to vector<1x256xi32>
    %258 = arith.cmpi slt, %33, %257 : vector<1x256xi32>
    %259 = arith.andi %256, %258 : vector<1x256xi1>
    %cst_101 = arith.constant 0.000000e+00 : f32
    %260 = vector.broadcast %cst_101 : f32 to vector<1x256xf32>
    %261 = arith.select %259, %254, %260 : vector<1x256xi1>, vector<1x256xf32>
    %c3 = arith.constant 3 : index
    %262 = memref.load %arg7[%c3] : memref<98xf32, #tpu.memory_space<smem>>
    %c0_102 = arith.constant 0 : index
    %c3_103 = arith.constant 3 : index
    %263 = vector.load %arg10[%c0_102, %c3_103] : memref<2x384xf32, #tpu.memory_space<vmem>>, vector<1x256xf32>
    %264 = vector.broadcast %262 : f32 to vector<1x256xf32>
    %265 = arith.mulf %264, %263 : vector<1x256xf32>
    %c52 = arith.constant 52 : index
    %266 = memref.load %arg7[%c52] : memref<98xf32, #tpu.memory_space<smem>>
    %c1_104 = arith.constant 1 : index
    %c3_105 = arith.constant 3 : index
    %267 = vector.load %arg10[%c1_104, %c3_105] : memref<2x384xf32, #tpu.memory_space<vmem>>, vector<1x256xf32>
    %268 = vector.broadcast %266 : f32 to vector<1x256xf32>
    %269 = arith.mulf %268, %267 : vector<1x256xf32>
    %270 = arith.addf %265, %269 : vector<1x256xf32>
    %c10 = arith.constant 10 : index
    %271 = memref.load %arg7[%c10] : memref<98xf32, #tpu.memory_space<smem>>
    %c0_106 = arith.constant 0 : index
    %c19 = arith.constant 19 : index
    %272 = vector.load %arg10[%c0_106, %c19] : memref<2x384xf32, #tpu.memory_space<vmem>>, vector<1x256xf32>
    %273 = vector.broadcast %271 : f32 to vector<1x256xf32>
    %274 = arith.mulf %273, %272 : vector<1x256xf32>
    %c59 = arith.constant 59 : index
    %275 = memref.load %arg7[%c59] : memref<98xf32, #tpu.memory_space<smem>>
    %c1_107 = arith.constant 1 : index
    %c19_108 = arith.constant 19 : index
    %276 = vector.load %arg10[%c1_107, %c19_108] : memref<2x384xf32, #tpu.memory_space<vmem>>, vector<1x256xf32>
    %277 = vector.broadcast %275 : f32 to vector<1x256xf32>
    %278 = arith.mulf %277, %276 : vector<1x256xf32>
    %279 = arith.addf %274, %278 : vector<1x256xf32>
    %280 = arith.addf %270, %279 : vector<1x256xf32>
    %c17_109 = arith.constant 17 : index
    %281 = memref.load %arg7[%c17_109] : memref<98xf32, #tpu.memory_space<smem>>
    %c0_110 = arith.constant 0 : index
    %c35_111 = arith.constant 35 : index
    %282 = vector.load %arg10[%c0_110, %c35_111] : memref<2x384xf32, #tpu.memory_space<vmem>>, vector<1x256xf32>
    %283 = vector.broadcast %281 : f32 to vector<1x256xf32>
    %284 = arith.mulf %283, %282 : vector<1x256xf32>
    %c66_112 = arith.constant 66 : index
    %285 = memref.load %arg7[%c66_112] : memref<98xf32, #tpu.memory_space<smem>>
    %c1_113 = arith.constant 1 : index
    %c35_114 = arith.constant 35 : index
    %286 = vector.load %arg10[%c1_113, %c35_114] : memref<2x384xf32, #tpu.memory_space<vmem>>, vector<1x256xf32>
    %287 = vector.broadcast %285 : f32 to vector<1x256xf32>
    %288 = arith.mulf %287, %286 : vector<1x256xf32>
    %289 = arith.addf %284, %288 : vector<1x256xf32>
    %290 = arith.addf %280, %289 : vector<1x256xf32>
    %c24 = arith.constant 24 : index
    %291 = memref.load %arg7[%c24] : memref<98xf32, #tpu.memory_space<smem>>
    %c0_115 = arith.constant 0 : index
    %c51_116 = arith.constant 51 : index
    %292 = vector.load %arg10[%c0_115, %c51_116] : memref<2x384xf32, #tpu.memory_space<vmem>>, vector<1x256xf32>
    %293 = vector.broadcast %291 : f32 to vector<1x256xf32>
    %294 = arith.mulf %293, %292 : vector<1x256xf32>
    %c73 = arith.constant 73 : index
    %295 = memref.load %arg7[%c73] : memref<98xf32, #tpu.memory_space<smem>>
    %c1_117 = arith.constant 1 : index
    %c51_118 = arith.constant 51 : index
    %296 = vector.load %arg10[%c1_117, %c51_118] : memref<2x384xf32, #tpu.memory_space<vmem>>, vector<1x256xf32>
    %297 = vector.broadcast %295 : f32 to vector<1x256xf32>
    %298 = arith.mulf %297, %296 : vector<1x256xf32>
    %299 = arith.addf %294, %298 : vector<1x256xf32>
    %300 = arith.addf %290, %299 : vector<1x256xf32>
    %c31 = arith.constant 31 : index
    %301 = memref.load %arg7[%c31] : memref<98xf32, #tpu.memory_space<smem>>
    %c0_119 = arith.constant 0 : index
    %c67 = arith.constant 67 : index
    %302 = vector.load %arg10[%c0_119, %c67] : memref<2x384xf32, #tpu.memory_space<vmem>>, vector<1x256xf32>
    %303 = vector.broadcast %301 : f32 to vector<1x256xf32>
    %304 = arith.mulf %303, %302 : vector<1x256xf32>
    %c80_120 = arith.constant 80 : index
    %305 = memref.load %arg7[%c80_120] : memref<98xf32, #tpu.memory_space<smem>>
    %c1_121 = arith.constant 1 : index
    %c67_122 = arith.constant 67 : index
    %306 = vector.load %arg10[%c1_121, %c67_122] : memref<2x384xf32, #tpu.memory_space<vmem>>, vector<1x256xf32>
    %307 = vector.broadcast %305 : f32 to vector<1x256xf32>
    %308 = arith.mulf %307, %306 : vector<1x256xf32>
    %309 = arith.addf %304, %308 : vector<1x256xf32>
    %310 = arith.addf %300, %309 : vector<1x256xf32>
    %c38 = arith.constant 38 : index
    %311 = memref.load %arg7[%c38] : memref<98xf32, #tpu.memory_space<smem>>
    %c0_123 = arith.constant 0 : index
    %c83 = arith.constant 83 : index
    %312 = vector.load %arg10[%c0_123, %c83] : memref<2x384xf32, #tpu.memory_space<vmem>>, vector<1x256xf32>
    %313 = vector.broadcast %311 : f32 to vector<1x256xf32>
    %314 = arith.mulf %313, %312 : vector<1x256xf32>
    %c87 = arith.constant 87 : index
    %315 = memref.load %arg7[%c87] : memref<98xf32, #tpu.memory_space<smem>>
    %c1_124 = arith.constant 1 : index
    %c83_125 = arith.constant 83 : index
    %316 = vector.load %arg10[%c1_124, %c83_125] : memref<2x384xf32, #tpu.memory_space<vmem>>, vector<1x256xf32>
    %317 = vector.broadcast %315 : f32 to vector<1x256xf32>
    %318 = arith.mulf %317, %316 : vector<1x256xf32>
    %319 = arith.addf %314, %318 : vector<1x256xf32>
    %320 = arith.addf %310, %319 : vector<1x256xf32>
    %c45 = arith.constant 45 : index
    %321 = memref.load %arg7[%c45] : memref<98xf32, #tpu.memory_space<smem>>
    %c0_126 = arith.constant 0 : index
    %c99 = arith.constant 99 : index
    %322 = vector.load %arg10[%c0_126, %c99] : memref<2x384xf32, #tpu.memory_space<vmem>>, vector<1x256xf32>
    %323 = vector.broadcast %321 : f32 to vector<1x256xf32>
    %324 = arith.mulf %323, %322 : vector<1x256xf32>
    %c94 = arith.constant 94 : index
    %325 = memref.load %arg7[%c94] : memref<98xf32, #tpu.memory_space<smem>>
    %c1_127 = arith.constant 1 : index
    %c99_128 = arith.constant 99 : index
    %326 = vector.load %arg10[%c1_127, %c99_128] : memref<2x384xf32, #tpu.memory_space<vmem>>, vector<1x256xf32>
    %327 = vector.broadcast %325 : f32 to vector<1x256xf32>
    %328 = arith.mulf %327, %326 : vector<1x256xf32>
    %329 = arith.addf %324, %328 : vector<1x256xf32>
    %330 = arith.addf %320, %329 : vector<1x256xf32>
    %c0_i32 = arith.constant 0 : i32
    %331 = vector.broadcast %c0_i32 : i32 to vector<1x256xi32>
    %332 = arith.cmpi sge, %33, %331 : vector<1x256xi32>
    %c16_i32 = arith.constant 16 : i32
    %333 = vector.broadcast %c16_i32 : i32 to vector<1x256xi32>
    %334 = arith.cmpi slt, %33, %333 : vector<1x256xi32>
    %335 = arith.andi %332, %334 : vector<1x256xi1>
    %cst_129 = arith.constant 0.000000e+00 : f32
    %336 = vector.broadcast %cst_129 : f32 to vector<1x256xf32>
    %337 = arith.select %335, %330, %336 : vector<1x256xi1>, vector<1x256xf32>
    %c4 = arith.constant 4 : index
    %338 = memref.load %arg7[%c4] : memref<98xf32, #tpu.memory_space<smem>>
    %c0_130 = arith.constant 0 : index
    %c4_131 = arith.constant 4 : index
    %339 = vector.load %arg10[%c0_130, %c4_131] : memref<2x384xf32, #tpu.memory_space<vmem>>, vector<1x256xf32>
    %340 = vector.broadcast %338 : f32 to vector<1x256xf32>
    %341 = arith.mulf %340, %339 : vector<1x256xf32>
    %c53 = arith.constant 53 : index
    %342 = memref.load %arg7[%c53] : memref<98xf32, #tpu.memory_space<smem>>
    %c1_132 = arith.constant 1 : index
    %c4_133 = arith.constant 4 : index
    %343 = vector.load %arg10[%c1_132, %c4_133] : memref<2x384xf32, #tpu.memory_space<vmem>>, vector<1x256xf32>
    %344 = vector.broadcast %342 : f32 to vector<1x256xf32>
    %345 = arith.mulf %344, %343 : vector<1x256xf32>
    %346 = arith.addf %341, %345 : vector<1x256xf32>
    %c11 = arith.constant 11 : index
    %347 = memref.load %arg7[%c11] : memref<98xf32, #tpu.memory_space<smem>>
    %c0_134 = arith.constant 0 : index
    %c20 = arith.constant 20 : index
    %348 = vector.load %arg10[%c0_134, %c20] : memref<2x384xf32, #tpu.memory_space<vmem>>, vector<1x256xf32>
    %349 = vector.broadcast %347 : f32 to vector<1x256xf32>
    %350 = arith.mulf %349, %348 : vector<1x256xf32>
    %c60 = arith.constant 60 : index
    %351 = memref.load %arg7[%c60] : memref<98xf32, #tpu.memory_space<smem>>
    %c1_135 = arith.constant 1 : index
    %c20_136 = arith.constant 20 : index
    %352 = vector.load %arg10[%c1_135, %c20_136] : memref<2x384xf32, #tpu.memory_space<vmem>>, vector<1x256xf32>
    %353 = vector.broadcast %351 : f32 to vector<1x256xf32>
    %354 = arith.mulf %353, %352 : vector<1x256xf32>
    %355 = arith.addf %350, %354 : vector<1x256xf32>
    %356 = arith.addf %346, %355 : vector<1x256xf32>
    %c18_137 = arith.constant 18 : index
    %357 = memref.load %arg7[%c18_137] : memref<98xf32, #tpu.memory_space<smem>>
    %c0_138 = arith.constant 0 : index
    %c36_139 = arith.constant 36 : index
    %358 = vector.load %arg10[%c0_138, %c36_139] : memref<2x384xf32, #tpu.memory_space<vmem>>, vector<1x256xf32>
    %359 = vector.broadcast %357 : f32 to vector<1x256xf32>
    %360 = arith.mulf %359, %358 : vector<1x256xf32>
    %c67_140 = arith.constant 67 : index
    %361 = memref.load %arg7[%c67_140] : memref<98xf32, #tpu.memory_space<smem>>
    %c1_141 = arith.constant 1 : index
    %c36_142 = arith.constant 36 : index
    %362 = vector.load %arg10[%c1_141, %c36_142] : memref<2x384xf32, #tpu.memory_space<vmem>>, vector<1x256xf32>
    %363 = vector.broadcast %361 : f32 to vector<1x256xf32>
    %364 = arith.mulf %363, %362 : vector<1x256xf32>
    %365 = arith.addf %360, %364 : vector<1x256xf32>
    %366 = arith.addf %356, %365 : vector<1x256xf32>
    %c25 = arith.constant 25 : index
    %367 = memref.load %arg7[%c25] : memref<98xf32, #tpu.memory_space<smem>>
    %c0_143 = arith.constant 0 : index
    %c52_144 = arith.constant 52 : index
    %368 = vector.load %arg10[%c0_143, %c52_144] : memref<2x384xf32, #tpu.memory_space<vmem>>, vector<1x256xf32>
    %369 = vector.broadcast %367 : f32 to vector<1x256xf32>
    %370 = arith.mulf %369, %368 : vector<1x256xf32>
    %c74 = arith.constant 74 : index
    %371 = memref.load %arg7[%c74] : memref<98xf32, #tpu.memory_space<smem>>
    %c1_145 = arith.constant 1 : index
    %c52_146 = arith.constant 52 : index
    %372 = vector.load %arg10[%c1_145, %c52_146] : memref<2x384xf32, #tpu.memory_space<vmem>>, vector<1x256xf32>
    %373 = vector.broadcast %371 : f32 to vector<1x256xf32>
    %374 = arith.mulf %373, %372 : vector<1x256xf32>
    %375 = arith.addf %370, %374 : vector<1x256xf32>
    %376 = arith.addf %366, %375 : vector<1x256xf32>
    %c32_147 = arith.constant 32 : index
    %377 = memref.load %arg7[%c32_147] : memref<98xf32, #tpu.memory_space<smem>>
    %c0_148 = arith.constant 0 : index
    %c68 = arith.constant 68 : index
    %378 = vector.load %arg10[%c0_148, %c68] : memref<2x384xf32, #tpu.memory_space<vmem>>, vector<1x256xf32>
    %379 = vector.broadcast %377 : f32 to vector<1x256xf32>
    %380 = arith.mulf %379, %378 : vector<1x256xf32>
    %c81_149 = arith.constant 81 : index
    %381 = memref.load %arg7[%c81_149] : memref<98xf32, #tpu.memory_space<smem>>
    %c1_150 = arith.constant 1 : index
    %c68_151 = arith.constant 68 : index
    %382 = vector.load %arg10[%c1_150, %c68_151] : memref<2x384xf32, #tpu.memory_space<vmem>>, vector<1x256xf32>
    %383 = vector.broadcast %381 : f32 to vector<1x256xf32>
    %384 = arith.mulf %383, %382 : vector<1x256xf32>
    %385 = arith.addf %380, %384 : vector<1x256xf32>
    %386 = arith.addf %376, %385 : vector<1x256xf32>
    %c39 = arith.constant 39 : index
    %387 = memref.load %arg7[%c39] : memref<98xf32, #tpu.memory_space<smem>>
    %c0_152 = arith.constant 0 : index
    %c84_153 = arith.constant 84 : index
    %388 = vector.load %arg10[%c0_152, %c84_153] : memref<2x384xf32, #tpu.memory_space<vmem>>, vector<1x256xf32>
    %389 = vector.broadcast %387 : f32 to vector<1x256xf32>
    %390 = arith.mulf %389, %388 : vector<1x256xf32>
    %c88 = arith.constant 88 : index
    %391 = memref.load %arg7[%c88] : memref<98xf32, #tpu.memory_space<smem>>
    %c1_154 = arith.constant 1 : index
    %c84_155 = arith.constant 84 : index
    %392 = vector.load %arg10[%c1_154, %c84_155] : memref<2x384xf32, #tpu.memory_space<vmem>>, vector<1x256xf32>
    %393 = vector.broadcast %391 : f32 to vector<1x256xf32>
    %394 = arith.mulf %393, %392 : vector<1x256xf32>
    %395 = arith.addf %390, %394 : vector<1x256xf32>
    %396 = arith.addf %386, %395 : vector<1x256xf32>
    %c46 = arith.constant 46 : index
    %397 = memref.load %arg7[%c46] : memref<98xf32, #tpu.memory_space<smem>>
    %c0_156 = arith.constant 0 : index
    %c100 = arith.constant 100 : index
    %398 = vector.load %arg10[%c0_156, %c100] : memref<2x384xf32, #tpu.memory_space<vmem>>, vector<1x256xf32>
    %399 = vector.broadcast %397 : f32 to vector<1x256xf32>
    %400 = arith.mulf %399, %398 : vector<1x256xf32>
    %c95 = arith.constant 95 : index
    %401 = memref.load %arg7[%c95] : memref<98xf32, #tpu.memory_space<smem>>
    %c1_157 = arith.constant 1 : index
    %c100_158 = arith.constant 100 : index
    %402 = vector.load %arg10[%c1_157, %c100_158] : memref<2x384xf32, #tpu.memory_space<vmem>>, vector<1x256xf32>
    %403 = vector.broadcast %401 : f32 to vector<1x256xf32>
    %404 = arith.mulf %403, %402 : vector<1x256xf32>
    %405 = arith.addf %400, %404 : vector<1x256xf32>
    %406 = arith.addf %396, %405 : vector<1x256xf32>
    %c-1_i32 = arith.constant -1 : i32
    %407 = vector.broadcast %c-1_i32 : i32 to vector<1x256xi32>
    %408 = arith.cmpi sge, %33, %407 : vector<1x256xi32>
    %c15_i32 = arith.constant 15 : i32
    %409 = vector.broadcast %c15_i32 : i32 to vector<1x256xi32>
    %410 = arith.cmpi slt, %33, %409 : vector<1x256xi32>
    %411 = arith.andi %408, %410 : vector<1x256xi1>
    %cst_159 = arith.constant 0.000000e+00 : f32
    %412 = vector.broadcast %cst_159 : f32 to vector<1x256xf32>
    %413 = arith.select %411, %406, %412 : vector<1x256xi1>, vector<1x256xf32>
    %c5 = arith.constant 5 : index
    %414 = memref.load %arg7[%c5] : memref<98xf32, #tpu.memory_space<smem>>
    %c0_160 = arith.constant 0 : index
    %c5_161 = arith.constant 5 : index
    %415 = vector.load %arg10[%c0_160, %c5_161] : memref<2x384xf32, #tpu.memory_space<vmem>>, vector<1x256xf32>
    %416 = vector.broadcast %414 : f32 to vector<1x256xf32>
    %417 = arith.mulf %416, %415 : vector<1x256xf32>
    %c54 = arith.constant 54 : index
    %418 = memref.load %arg7[%c54] : memref<98xf32, #tpu.memory_space<smem>>
    %c1_162 = arith.constant 1 : index
    %c5_163 = arith.constant 5 : index
    %419 = vector.load %arg10[%c1_162, %c5_163] : memref<2x384xf32, #tpu.memory_space<vmem>>, vector<1x256xf32>
    %420 = vector.broadcast %418 : f32 to vector<1x256xf32>
    %421 = arith.mulf %420, %419 : vector<1x256xf32>
    %422 = arith.addf %417, %421 : vector<1x256xf32>
    %c12 = arith.constant 12 : index
    %423 = memref.load %arg7[%c12] : memref<98xf32, #tpu.memory_space<smem>>
    %c0_164 = arith.constant 0 : index
    %c21_165 = arith.constant 21 : index
    %424 = vector.load %arg10[%c0_164, %c21_165] : memref<2x384xf32, #tpu.memory_space<vmem>>, vector<1x256xf32>
    %425 = vector.broadcast %423 : f32 to vector<1x256xf32>
    %426 = arith.mulf %425, %424 : vector<1x256xf32>
    %c61 = arith.constant 61 : index
    %427 = memref.load %arg7[%c61] : memref<98xf32, #tpu.memory_space<smem>>
    %c1_166 = arith.constant 1 : index
    %c21_167 = arith.constant 21 : index
    %428 = vector.load %arg10[%c1_166, %c21_167] : memref<2x384xf32, #tpu.memory_space<vmem>>, vector<1x256xf32>
    %429 = vector.broadcast %427 : f32 to vector<1x256xf32>
    %430 = arith.mulf %429, %428 : vector<1x256xf32>
    %431 = arith.addf %426, %430 : vector<1x256xf32>
    %432 = arith.addf %422, %431 : vector<1x256xf32>
    %c19_168 = arith.constant 19 : index
    %433 = memref.load %arg7[%c19_168] : memref<98xf32, #tpu.memory_space<smem>>
    %c0_169 = arith.constant 0 : index
    %c37_170 = arith.constant 37 : index
    %434 = vector.load %arg10[%c0_169, %c37_170] : memref<2x384xf32, #tpu.memory_space<vmem>>, vector<1x256xf32>
    %435 = vector.broadcast %433 : f32 to vector<1x256xf32>
    %436 = arith.mulf %435, %434 : vector<1x256xf32>
    %c68_171 = arith.constant 68 : index
    %437 = memref.load %arg7[%c68_171] : memref<98xf32, #tpu.memory_space<smem>>
    %c1_172 = arith.constant 1 : index
    %c37_173 = arith.constant 37 : index
    %438 = vector.load %arg10[%c1_172, %c37_173] : memref<2x384xf32, #tpu.memory_space<vmem>>, vector<1x256xf32>
    %439 = vector.broadcast %437 : f32 to vector<1x256xf32>
    %440 = arith.mulf %439, %438 : vector<1x256xf32>
    %441 = arith.addf %436, %440 : vector<1x256xf32>
    %442 = arith.addf %432, %441 : vector<1x256xf32>
    %c26 = arith.constant 26 : index
    %443 = memref.load %arg7[%c26] : memref<98xf32, #tpu.memory_space<smem>>
    %c0_174 = arith.constant 0 : index
    %c53_175 = arith.constant 53 : index
    %444 = vector.load %arg10[%c0_174, %c53_175] : memref<2x384xf32, #tpu.memory_space<vmem>>, vector<1x256xf32>
    %445 = vector.broadcast %443 : f32 to vector<1x256xf32>
    %446 = arith.mulf %445, %444 : vector<1x256xf32>
    %c75 = arith.constant 75 : index
    %447 = memref.load %arg7[%c75] : memref<98xf32, #tpu.memory_space<smem>>
    %c1_176 = arith.constant 1 : index
    %c53_177 = arith.constant 53 : index
    %448 = vector.load %arg10[%c1_176, %c53_177] : memref<2x384xf32, #tpu.memory_space<vmem>>, vector<1x256xf32>
    %449 = vector.broadcast %447 : f32 to vector<1x256xf32>
    %450 = arith.mulf %449, %448 : vector<1x256xf32>
    %451 = arith.addf %446, %450 : vector<1x256xf32>
    %452 = arith.addf %442, %451 : vector<1x256xf32>
    %c33_178 = arith.constant 33 : index
    %453 = memref.load %arg7[%c33_178] : memref<98xf32, #tpu.memory_space<smem>>
    %c0_179 = arith.constant 0 : index
    %c69 = arith.constant 69 : index
    %454 = vector.load %arg10[%c0_179, %c69] : memref<2x384xf32, #tpu.memory_space<vmem>>, vector<1x256xf32>
    %455 = vector.broadcast %453 : f32 to vector<1x256xf32>
    %456 = arith.mulf %455, %454 : vector<1x256xf32>
    %c82_180 = arith.constant 82 : index
    %457 = memref.load %arg7[%c82_180] : memref<98xf32, #tpu.memory_space<smem>>
    %c1_181 = arith.constant 1 : index
    %c69_182 = arith.constant 69 : index
    %458 = vector.load %arg10[%c1_181, %c69_182] : memref<2x384xf32, #tpu.memory_space<vmem>>, vector<1x256xf32>
    %459 = vector.broadcast %457 : f32 to vector<1x256xf32>
    %460 = arith.mulf %459, %458 : vector<1x256xf32>
    %461 = arith.addf %456, %460 : vector<1x256xf32>
    %462 = arith.addf %452, %461 : vector<1x256xf32>
    %c40 = arith.constant 40 : index
    %463 = memref.load %arg7[%c40] : memref<98xf32, #tpu.memory_space<smem>>
    %c0_183 = arith.constant 0 : index
    %c85_184 = arith.constant 85 : index
    %464 = vector.load %arg10[%c0_183, %c85_184] : memref<2x384xf32, #tpu.memory_space<vmem>>, vector<1x256xf32>
    %465 = vector.broadcast %463 : f32 to vector<1x256xf32>
    %466 = arith.mulf %465, %464 : vector<1x256xf32>
    %c89 = arith.constant 89 : index
    %467 = memref.load %arg7[%c89] : memref<98xf32, #tpu.memory_space<smem>>
    %c1_185 = arith.constant 1 : index
    %c85_186 = arith.constant 85 : index
    %468 = vector.load %arg10[%c1_185, %c85_186] : memref<2x384xf32, #tpu.memory_space<vmem>>, vector<1x256xf32>
    %469 = vector.broadcast %467 : f32 to vector<1x256xf32>
    %470 = arith.mulf %469, %468 : vector<1x256xf32>
    %471 = arith.addf %466, %470 : vector<1x256xf32>
    %472 = arith.addf %462, %471 : vector<1x256xf32>
    %c47 = arith.constant 47 : index
    %473 = memref.load %arg7[%c47] : memref<98xf32, #tpu.memory_space<smem>>
    %c0_187 = arith.constant 0 : index
    %c101 = arith.constant 101 : index
    %474 = vector.load %arg10[%c0_187, %c101] : memref<2x384xf32, #tpu.memory_space<vmem>>, vector<1x256xf32>
    %475 = vector.broadcast %473 : f32 to vector<1x256xf32>
    %476 = arith.mulf %475, %474 : vector<1x256xf32>
    %c96_188 = arith.constant 96 : index
    %477 = memref.load %arg7[%c96_188] : memref<98xf32, #tpu.memory_space<smem>>
    %c1_189 = arith.constant 1 : index
    %c101_190 = arith.constant 101 : index
    %478 = vector.load %arg10[%c1_189, %c101_190] : memref<2x384xf32, #tpu.memory_space<vmem>>, vector<1x256xf32>
    %479 = vector.broadcast %477 : f32 to vector<1x256xf32>
    %480 = arith.mulf %479, %478 : vector<1x256xf32>
    %481 = arith.addf %476, %480 : vector<1x256xf32>
    %482 = arith.addf %472, %481 : vector<1x256xf32>
    %c-2_i32 = arith.constant -2 : i32
    %483 = vector.broadcast %c-2_i32 : i32 to vector<1x256xi32>
    %484 = arith.cmpi sge, %33, %483 : vector<1x256xi32>
    %c14_i32 = arith.constant 14 : i32
    %485 = vector.broadcast %c14_i32 : i32 to vector<1x256xi32>
    %486 = arith.cmpi slt, %33, %485 : vector<1x256xi32>
    %487 = arith.andi %484, %486 : vector<1x256xi1>
    %cst_191 = arith.constant 0.000000e+00 : f32
    %488 = vector.broadcast %cst_191 : f32 to vector<1x256xf32>
    %489 = arith.select %487, %482, %488 : vector<1x256xi1>, vector<1x256xf32>
    %c6 = arith.constant 6 : index
    %490 = memref.load %arg7[%c6] : memref<98xf32, #tpu.memory_space<smem>>
    %c0_192 = arith.constant 0 : index
    %c6_193 = arith.constant 6 : index
    %491 = vector.load %arg10[%c0_192, %c6_193] : memref<2x384xf32, #tpu.memory_space<vmem>>, vector<1x256xf32>
    %492 = vector.broadcast %490 : f32 to vector<1x256xf32>
    %493 = arith.mulf %492, %491 : vector<1x256xf32>
    %c55 = arith.constant 55 : index
    %494 = memref.load %arg7[%c55] : memref<98xf32, #tpu.memory_space<smem>>
    %c1_194 = arith.constant 1 : index
    %c6_195 = arith.constant 6 : index
    %495 = vector.load %arg10[%c1_194, %c6_195] : memref<2x384xf32, #tpu.memory_space<vmem>>, vector<1x256xf32>
    %496 = vector.broadcast %494 : f32 to vector<1x256xf32>
    %497 = arith.mulf %496, %495 : vector<1x256xf32>
    %498 = arith.addf %493, %497 : vector<1x256xf32>
    %c13 = arith.constant 13 : index
    %499 = memref.load %arg7[%c13] : memref<98xf32, #tpu.memory_space<smem>>
    %c0_196 = arith.constant 0 : index
    %c22_197 = arith.constant 22 : index
    %500 = vector.load %arg10[%c0_196, %c22_197] : memref<2x384xf32, #tpu.memory_space<vmem>>, vector<1x256xf32>
    %501 = vector.broadcast %499 : f32 to vector<1x256xf32>
    %502 = arith.mulf %501, %500 : vector<1x256xf32>
    %c62 = arith.constant 62 : index
    %503 = memref.load %arg7[%c62] : memref<98xf32, #tpu.memory_space<smem>>
    %c1_198 = arith.constant 1 : index
    %c22_199 = arith.constant 22 : index
    %504 = vector.load %arg10[%c1_198, %c22_199] : memref<2x384xf32, #tpu.memory_space<vmem>>, vector<1x256xf32>
    %505 = vector.broadcast %503 : f32 to vector<1x256xf32>
    %506 = arith.mulf %505, %504 : vector<1x256xf32>
    %507 = arith.addf %502, %506 : vector<1x256xf32>
    %508 = arith.addf %498, %507 : vector<1x256xf32>
    %c20_200 = arith.constant 20 : index
    %509 = memref.load %arg7[%c20_200] : memref<98xf32, #tpu.memory_space<smem>>
    %c0_201 = arith.constant 0 : index
    %c38_202 = arith.constant 38 : index
    %510 = vector.load %arg10[%c0_201, %c38_202] : memref<2x384xf32, #tpu.memory_space<vmem>>, vector<1x256xf32>
    %511 = vector.broadcast %509 : f32 to vector<1x256xf32>
    %512 = arith.mulf %511, %510 : vector<1x256xf32>
    %c69_203 = arith.constant 69 : index
    %513 = memref.load %arg7[%c69_203] : memref<98xf32, #tpu.memory_space<smem>>
    %c1_204 = arith.constant 1 : index
    %c38_205 = arith.constant 38 : index
    %514 = vector.load %arg10[%c1_204, %c38_205] : memref<2x384xf32, #tpu.memory_space<vmem>>, vector<1x256xf32>
    %515 = vector.broadcast %513 : f32 to vector<1x256xf32>
    %516 = arith.mulf %515, %514 : vector<1x256xf32>
    %517 = arith.addf %512, %516 : vector<1x256xf32>
    %518 = arith.addf %508, %517 : vector<1x256xf32>
    %c27 = arith.constant 27 : index
    %519 = memref.load %arg7[%c27] : memref<98xf32, #tpu.memory_space<smem>>
    %c0_206 = arith.constant 0 : index
    %c54_207 = arith.constant 54 : index
    %520 = vector.load %arg10[%c0_206, %c54_207] : memref<2x384xf32, #tpu.memory_space<vmem>>, vector<1x256xf32>
    %521 = vector.broadcast %519 : f32 to vector<1x256xf32>
    %522 = arith.mulf %521, %520 : vector<1x256xf32>
    %c76 = arith.constant 76 : index
    %523 = memref.load %arg7[%c76] : memref<98xf32, #tpu.memory_space<smem>>
    %c1_208 = arith.constant 1 : index
    %c54_209 = arith.constant 54 : index
    %524 = vector.load %arg10[%c1_208, %c54_209] : memref<2x384xf32, #tpu.memory_space<vmem>>, vector<1x256xf32>
    %525 = vector.broadcast %523 : f32 to vector<1x256xf32>
    %526 = arith.mulf %525, %524 : vector<1x256xf32>
    %527 = arith.addf %522, %526 : vector<1x256xf32>
    %528 = arith.addf %518, %527 : vector<1x256xf32>
    %c34_210 = arith.constant 34 : index
    %529 = memref.load %arg7[%c34_210] : memref<98xf32, #tpu.memory_space<smem>>
    %c0_211 = arith.constant 0 : index
    %c70_212 = arith.constant 70 : index
    %530 = vector.load %arg10[%c0_211, %c70_212] : memref<2x384xf32, #tpu.memory_space<vmem>>, vector<1x256xf32>
    %531 = vector.broadcast %529 : f32 to vector<1x256xf32>
    %532 = arith.mulf %531, %530 : vector<1x256xf32>
    %c83_213 = arith.constant 83 : index
    %533 = memref.load %arg7[%c83_213] : memref<98xf32, #tpu.memory_space<smem>>
    %c1_214 = arith.constant 1 : index
    %c70_215 = arith.constant 70 : index
    %534 = vector.load %arg10[%c1_214, %c70_215] : memref<2x384xf32, #tpu.memory_space<vmem>>, vector<1x256xf32>
    %535 = vector.broadcast %533 : f32 to vector<1x256xf32>
    %536 = arith.mulf %535, %534 : vector<1x256xf32>
    %537 = arith.addf %532, %536 : vector<1x256xf32>
    %538 = arith.addf %528, %537 : vector<1x256xf32>
    %c41 = arith.constant 41 : index
    %539 = memref.load %arg7[%c41] : memref<98xf32, #tpu.memory_space<smem>>
    %c0_216 = arith.constant 0 : index
    %c86_217 = arith.constant 86 : index
    %540 = vector.load %arg10[%c0_216, %c86_217] : memref<2x384xf32, #tpu.memory_space<vmem>>, vector<1x256xf32>
    %541 = vector.broadcast %539 : f32 to vector<1x256xf32>
    %542 = arith.mulf %541, %540 : vector<1x256xf32>
    %c90 = arith.constant 90 : index
    %543 = memref.load %arg7[%c90] : memref<98xf32, #tpu.memory_space<smem>>
    %c1_218 = arith.constant 1 : index
    %c86_219 = arith.constant 86 : index
    %544 = vector.load %arg10[%c1_218, %c86_219] : memref<2x384xf32, #tpu.memory_space<vmem>>, vector<1x256xf32>
    %545 = vector.broadcast %543 : f32 to vector<1x256xf32>
    %546 = arith.mulf %545, %544 : vector<1x256xf32>
    %547 = arith.addf %542, %546 : vector<1x256xf32>
    %548 = arith.addf %538, %547 : vector<1x256xf32>
    %c48_220 = arith.constant 48 : index
    %549 = memref.load %arg7[%c48_220] : memref<98xf32, #tpu.memory_space<smem>>
    %c0_221 = arith.constant 0 : index
    %c102 = arith.constant 102 : index
    %550 = vector.load %arg10[%c0_221, %c102] : memref<2x384xf32, #tpu.memory_space<vmem>>, vector<1x256xf32>
    %551 = vector.broadcast %549 : f32 to vector<1x256xf32>
    %552 = arith.mulf %551, %550 : vector<1x256xf32>
    %c97_222 = arith.constant 97 : index
    %553 = memref.load %arg7[%c97_222] : memref<98xf32, #tpu.memory_space<smem>>
    %c1_223 = arith.constant 1 : index
    %c102_224 = arith.constant 102 : index
    %554 = vector.load %arg10[%c1_223, %c102_224] : memref<2x384xf32, #tpu.memory_space<vmem>>, vector<1x256xf32>
    %555 = vector.broadcast %553 : f32 to vector<1x256xf32>
    %556 = arith.mulf %555, %554 : vector<1x256xf32>
    %557 = arith.addf %552, %556 : vector<1x256xf32>
    %558 = arith.addf %548, %557 : vector<1x256xf32>
    %c-3_i32 = arith.constant -3 : i32
    %559 = vector.broadcast %c-3_i32 : i32 to vector<1x256xi32>
    %560 = arith.cmpi sge, %33, %559 : vector<1x256xi32>
    %c13_i32 = arith.constant 13 : i32
    %561 = vector.broadcast %c13_i32 : i32 to vector<1x256xi32>
    %562 = arith.cmpi slt, %33, %561 : vector<1x256xi32>
    %563 = arith.andi %560, %562 : vector<1x256xi1>
    %cst_225 = arith.constant 0.000000e+00 : f32
    %564 = vector.broadcast %cst_225 : f32 to vector<1x256xf32>
    %565 = arith.select %563, %558, %564 : vector<1x256xi1>, vector<1x256xf32>
    %566 = arith.addf %109, %185 : vector<1x256xf32>
    %567 = arith.addf %261, %337 : vector<1x256xf32>
    %568 = arith.addf %566, %567 : vector<1x256xf32>
    %569 = arith.addf %413, %489 : vector<1x256xf32>
    %c0_226 = arith.constant 0 : index
    %570 = memref.load %arg8[%c0_226] : memref<1xf32, #tpu.memory_space<smem>>
    %571 = vector.broadcast %570 : f32 to vector<1x256xf32>
    %572 = arith.addf %565, %571 : vector<1x256xf32>
    %573 = arith.addf %569, %572 : vector<1x256xf32>
    %574 = arith.addf %568, %573 : vector<1x256xf32>
    %575 = arith.negf %574 : vector<1x256xf32>
    %576 = math.exp %575 : vector<1x256xf32>
    %cst_227 = arith.constant 1.000000e+00 : f32
    %577 = vector.broadcast %cst_227 : f32 to vector<1x256xf32>
    %578 = arith.addf %577, %576 : vector<1x256xf32>
    %579 = arith.divf %577, %578 : vector<1x256xf32>
    %580 = vector.broadcast %579 : vector<1x256xf32> to vector<128x256xf32>
    %581 = arith.mulf %22, %580 : vector<128x256xf32>
    %c0_228 = arith.constant 0 : index
    %c0_229 = arith.constant 0 : index
    %c0_230 = arith.constant 0 : index
    %582 = vector.load %arg9[%c0_228, %c0_229, %c0_230] : memref<1x128x256xf32, #tpu.memory_space<vmem>>, vector<1x128x256xf32>
    %583 = vector.shape_cast %582 : vector<1x128x256xf32> to vector<128x256xf32>
    %584 = vector.shape_cast %581 : vector<128x256xf32> to vector<1x128x256xf32>
    tpu.vector_store %arg9[%c0_228, %c0_229, %c0_230], %584 {strides = array<i32>} : memref<1x128x256xf32, #tpu.memory_space<vmem>>, vector<1x128x256xf32>,
    return
  }
  func.func @transform_0(%arg0: i32) -> (i32, i32, i32) {
    %c0_i32 = arith.constant 0 : i32
    %c0_i32_0 = arith.constant 0 : i32
    %c0_i32_1 = arith.constant 0 : i32
    return %arg0, %c0_i32, %c0_i32_0 : i32, i32, i32
  }
  func.func @transform_1(%arg0: i32) -> (i32, i32) {
    %c0_i32 = arith.constant 0 : i32
    %c0_i32_0 = arith.constant 0 : i32
    %c0_i32_1 = arith.constant 0 : i32
    return %c0_i32, %c0_i32_0 : i32, i32
  }
  func.func @transform_2(%arg0: i32) -> (i32, i32) {
    %c0_i32 = arith.constant 0 : i32
    %c0_i32_0 = arith.constant 0 : i32
    %c0_i32_1 = arith.constant 0 : i32
    return %c0_i32, %c0_i32_0 : i32, i32
  }
  func.func @transform_3(%arg0: i32) -> (i32, i32) {
    %c0_i32 = arith.constant 0 : i32
    %c0_i32_0 = arith.constant 0 : i32
    %c0_i32_1 = arith.constant 0 : i32
    return %c0_i32, %c0_i32_0 : i32, i32
  }
  func.func @transform_4(%arg0: i32) -> (i32, i32) {
    %c0_i32 = arith.constant 0 : i32
    %c0_i32_0 = arith.constant 0 : i32
    %c0_i32_1 = arith.constant 0 : i32
    return %c0_i32, %c0_i32_0 : i32, i32
  }
  func.func @transform_5(%arg0: i32) -> (i32, i32) {
    %c0_i32 = arith.constant 0 : i32
    %c0_i32_0 = arith.constant 0 : i32
    %c0_i32_1 = arith.constant 0 : i32
    return %c0_i32, %c0_i32_0 : i32, i32
  }
  func.func @transform_6(%arg0: i32) -> i32 {
    %c0_i32 = arith.constant 0 : i32
    %c0_i32_0 = arith.constant 0 : i32
    return %c0_i32 : i32
  }
  func.func @transform_7(%arg0: i32) -> i32 {
    %c0_i32 = arith.constant 0 : i32
    %c0_i32_0 = arith.constant 0 : i32
    return %c0_i32 : i32
  }
  func.func @transform_8(%arg0: i32) -> (i32, i32, i32) {
    %c0_i32 = arith.constant 0 : i32
    %c0_i32_0 = arith.constant 0 : i32
    %c0_i32_1 = arith.constant 0 : i32
    return %arg0, %c0_i32, %c0_i32_0 : i32, i32, i32
  }
}

</mosaic_0001>

<llo_original>
// kernel: cbam_pallas.1
$region0: #{cbam_pallas.1}
  #allocation0 [shape = 'u32[]', space=smem, size = 0x4, offset = 0x4, fixed_abs, tag = 'smem constant byte address 0x4 - core index']
  #allocation1 [shape = 'u32[144,128]{1,0:T(1,128)}', space=vmem, size = 0x12000, scoped, tag = 'internal scratch']
  #allocation2 [shape = 'f32[2,384]{1,0:T(2,128)}', space=vmem, size = 0xc00, scoped, tag = 'scratch operand']
  #allocation3 [shape = 'f32[1]{0:T(128)S(6)}', space=smem, size = 0x200, scoped, tag = 'scoped memory for cbam_pallas.1']
  %s0 = inlined_call_operand.vmem [shape: f32[2,128,256], index: 0, kind: input, shape index: {}]
  %s1 = inlined_call_operand.vmem [shape: f32[8,128], index: 1, kind: input, shape index: {}]
  %s2 = inlined_call_operand.vmem [shape: f32[8,1], index: 2, kind: input, shape index: {}]
  %s3 = inlined_call_operand.vmem [shape: f32[128,8], index: 3, kind: input, shape index: {}]
  %s4 = inlined_call_operand.vmem [shape: f32[128,1], index: 4, kind: input, shape index: {}]
  %s5 = inlined_call_operand.vmem [shape: s32[1,256], index: 5, kind: input, shape index: {}]
  %s6 = inlined_call_operand.vmem [shape: f32[98], index: 6, kind: input, shape index: {}]
  %s7 = inlined_call_operand.<no memory space> [shape: f32[1], index: 7, kind: input, shape index: {}]
  %s8 = inlined_call_operand.vmem [shape: f32[2,128,256], index: 8, kind: output, shape index: {}]
  %s9 = sld [smem:[#allocation0]]
  $region69: #{cbam_pallas.1} parent=0
    _
  %s11 = ssub.s32 1, %s9
  %s12 = scalar_select 0, %s11, %s9
  %13 = sst [smem:[#allocation3]] %s7
  $region1: #{cbam_pallas.1} parent=0
    #allocation4 [shape = 'u8[512]{0}', space=smem, size = 0x200, scoped, tag = 'input window, operand 6, single buffered']
    #allocation5 [shape = 's32[2]{0}', space=sflag, size = 0x8, scoped, tag = 'scoped memory for cbam_pallas.1']
    %14 = vsyncpa [#allocation5], 0
    loop: start=0, step=1, limit=4
    $region2: #{cbam_pallas.1} parent=1 // loop_pre_header
      _
    $region3: #{cbam_pallas.1} parent=1 // loop_header
      %s16 = sphi 0, %s20
      %p17 = scmp.ge.s32.totalorder %s16, 4
      %s26 = sphi 0, %s28
      %s29 = sphi 0, %s26
      %s30 = sphi 0, %s29
      %s46 = sphi 0, %s30
      %s50 = sphi 0, %s50
      %s52 = sphi 0, %s50
      %s53 = sphi 0, %s52
      %s67 = sphi 0, %s53
      %s71 = sphi 0, %s71
      %s73 = sphi 0, %s71
      %s74 = sphi 0, %s73
      %s88 = sphi 0, %s74
      %s92 = sphi 0, %s92
      %s94 = sphi 0, %s92
      %s95 = sphi 0, %s94
      %s109 = sphi 0, %s95
      %s113 = sphi 0, %s113
      %s115 = sphi 0, %s113
      %s116 = sphi 0, %s115
      %s130 = sphi 0, %s116
      %s134 = sphi 0, %s134
      %s136 = sphi 0, %s134
      %s137 = sphi 0, %s136
      %s151 = sphi 0, %s137
      %s155 = sphi 0, %s155
      %s157 = sphi 0, %s155
      %s158 = sphi 0, %s157
      %s172 = sphi 0, %s158
      %s176 = sphi 0, %s176
      %s178 = sphi 0, %s176
      %s179 = sphi 0, %s178
      %s193 = sphi 0, %s179
      %s199 = sphi 0, %s201
      %s202 = sphi 0, %s199
      %s203 = sphi 0, %s202
      %s219 = sphi 0, %s203
    $region4: #{cbam_pallas.1} parent=1 // loop_header_branch
      %19 = sbr.rel (%p17) target = $region8
    $region5: #{cbam_pallas.1} parent=1 // loop_body
      %s21 = ssub.s32 %s16, 1
      %s22 = ssub.s32 %s16, 2
      %s23 = sadd.s32 %s16, 1
      %s24 = ssub.s32 %s16, %s23
      %p25 = scmp.eq.s32.totalorder %s24, 0
      %s27 = sadd.s32 %s26, 1
      %s28 = scalar_select %p25, %s26, %s27
      %p31 = pneg %p25
      %p32 = scmp.eq.s32.totalorder %s16, 1
      %p33 = por %p31, %p32
      %p34 = scmp.ne.s32.totalorder %s26, %s29
      %p35 = scmp.eq.s32.totalorder %s16, 0
      %p36 = por %p34, %p35
      %p37 = scmp.ne.s32.totalorder %s26, %s29
      %p38 = scmp.eq.s32.totalorder %s21, 1
      %p39 = por %p37, %p38
      %p40 = scmp.ne.s32.totalorder %s29, %s30
      %p41 = scmp.eq.s32.totalorder %s21, 0
      %p42 = por %p40, %p41
      %p43 = scmp.ne.s32.totalorder %s29, %s30
      %p44 = scmp.eq.s32.totalorder %s22, 1
      %p45 = por %p43, %p44
      %p47 = scmp.ne.s32.totalorder %s30, %s46
      %p48 = scmp.eq.s32.totalorder %s22, 0
      %p49 = por %p47, %p48
      %s51 = sadd.s32 %s50, 1
      %p54 = scmp.eq.s32.totalorder %s16, 1
      %p55 = scmp.ne.s32.totalorder %s50, %s52
      %p56 = scmp.eq.s32.totalorder %s16, 0
      %p57 = por %p55, %p56
      %p58 = scmp.ne.s32.totalorder %s50, %s52
      %p59 = scmp.eq.s32.totalorder %s21, 1
      %p60 = por %p58, %p59
      %p61 = scmp.ne.s32.totalorder %s52, %s53
      %p62 = scmp.eq.s32.totalorder %s21, 0
      %p63 = por %p61, %p62
      %p64 = scmp.ne.s32.totalorder %s52, %s53
      %p65 = scmp.eq.s32.totalorder %s22, 1
      %p66 = por %p64, %p65
      %p68 = scmp.ne.s32.totalorder %s53, %s67
      %p69 = scmp.eq.s32.totalorder %s22, 0
      %p70 = por %p68, %p69
      %s72 = sadd.s32 %s71, 1
      %p75 = scmp.eq.s32.totalorder %s16, 1
      %p76 = scmp.ne.s32.totalorder %s71, %s73
      %p77 = scmp.eq.s32.totalorder %s16, 0
      %p78 = por %p76, %p77
      %p79 = scmp.ne.s32.totalorder %s71, %s73
      %p80 = scmp.eq.s32.totalorder %s21, 1
      %p81 = por %p79, %p80
      %p82 = scmp.ne.s32.totalorder %s73, %s74
      %p83 = scmp.eq.s32.totalorder %s21, 0
      %p84 = por %p82, %p83
      %p85 = scmp.ne.s32.totalorder %s73, %s74
      %p86 = scmp.eq.s32.totalorder %s22, 1
      %p87 = por %p85, %p86
      %p89 = scmp.ne.s32.totalorder %s74, %s88
      %p90 = scmp.eq.s32.totalorder %s22, 0
      %p91 = por %p89, %p90
      %s93 = sadd.s32 %s92, 1
      %p96 = scmp.eq.s32.totalorder %s16, 1
      %p97 = scmp.ne.s32.totalorder %s92, %s94
      %p98 = scmp.eq.s32.totalorder %s16, 0
      %p99 = por %p97, %p98
      %p100 = scmp.ne.s32.totalorder %s92, %s94
      %p101 = scmp.eq.s32.totalorder %s21, 1
      %p102 = por %p100, %p101
      %p103 = scmp.ne.s32.totalorder %s94, %s95
      %p104 = scmp.eq.s32.totalorder %s21, 0
      %p105 = por %p103, %p104
      %p106 = scmp.ne.s32.totalorder %s94, %s95
      %p107 = scmp.eq.s32.totalorder %s22, 1
      %p108 = por %p106, %p107
      %p110 = scmp.ne.s32.totalorder %s95, %s109
      %p111 = scmp.eq.s32.totalorder %s22, 0
      %p112 = por %p110, %p111
      %s114 = sadd.s32 %s113, 1
      %p117 = scmp.eq.s32.totalorder %s16, 1
      %p118 = scmp.ne.s32.totalorder %s113, %s115
      %p119 = scmp.eq.s32.totalorder %s16, 0
      %p120 = por %p118, %p119
      %p121 = scmp.ne.s32.totalorder %s113, %s115
      %p122 = scmp.eq.s32.totalorder %s21, 1
      %p123 = por %p121, %p122
      %p124 = scmp.ne.s32.totalorder %s115, %s116
      %p125 = scmp.eq.s32.totalorder %s21, 0
      %p126 = por %p124, %p125
      %p127 = scmp.ne.s32.totalorder %s115, %s116
      %p128 = scmp.eq.s32.totalorder %s22, 1
      %p129 = por %p127, %p128
      %p131 = scmp.ne.s32.totalorder %s116, %s130
      %p132 = scmp.eq.s32.totalorder %s22, 0
      %p133 = por %p131, %p132
      %s135 = sadd.s32 %s134, 1
      %p138 = scmp.eq.s32.totalorder %s16, 1
      %p139 = scmp.ne.s32.totalorder %s134, %s136
      %p140 = scmp.eq.s32.totalorder %s16, 0
      %p141 = por %p139, %p140
      %p142 = scmp.ne.s32.totalorder %s134, %s136
      %p143 = scmp.eq.s32.totalorder %s21, 1
      %p144 = por %p142, %p143
      %p145 = scmp.ne.s32.totalorder %s136, %s137
      %p146 = scmp.eq.s32.totalorder %s21, 0
      %p147 = por %p145, %p146
      %p148 = scmp.ne.s32.totalorder %s136, %s137
      %p149 = scmp.eq.s32.totalorder %s22, 1
      %p150 = por %p148, %p149
      %p152 = scmp.ne.s32.totalorder %s137, %s151
      %p153 = scmp.eq.s32.totalorder %s22, 0
      %p154 = por %p152, %p153
      %s156 = sadd.s32 %s155, 1
      %p159 = scmp.eq.s32.totalorder %s16, 1
      %p160 = scmp.ne.s32.totalorder %s155, %s157
      %p161 = scmp.eq.s32.totalorder %s16, 0
      %p162 = por %p160, %p161
      %p163 = scmp.ne.s32.totalorder %s155, %s157
      %p164 = scmp.eq.s32.totalorder %s21, 1
      %p165 = por %p163, %p164
      %p166 = scmp.ne.s32.totalorder %s157, %s158
      %p167 = scmp.eq.s32.totalorder %s21, 0
      %p168 = por %p166, %p167
      %p169 = scmp.ne.s32.totalorder %s157, %s158
      %p170 = scmp.eq.s32.totalorder %s22, 1
      %p171 = por %p169, %p170
      %p173 = scmp.ne.s32.totalorder %s158, %s172
      %p174 = scmp.eq.s32.totalorder %s22, 0
      %p175 = por %p173, %p174
      %s177 = sadd.s32 %s176, 1
      %p180 = scmp.eq.s32.totalorder %s16, 1
      %p181 = scmp.ne.s32.totalorder %s176, %s178
      %p182 = scmp.eq.s32.totalorder %s16, 0
      %p183 = por %p181, %p182
      %p184 = scmp.ne.s32.totalorder %s176, %s178
      %p185 = scmp.eq.s32.totalorder %s21, 1
      %p186 = por %p184, %p185
      %p187 = scmp.ne.s32.totalorder %s178, %s179
      %p188 = scmp.eq.s32.totalorder %s21, 0
      %p189 = por %p187, %p188
      %p190 = scmp.ne.s32.totalorder %s178, %s179
      %p191 = scmp.eq.s32.totalorder %s22, 1
      %p192 = por %p190, %p191
      %p194 = scmp.ne.s32.totalorder %s179, %s193
      %p195 = scmp.eq.s32.totalorder %s22, 0
      %p196 = por %p194, %p195
      %s197 = ssub.s32 %s16, %s23
      %p198 = scmp.eq.s32.totalorder %s197, 0
      %s200 = sadd.s32 %s199, 1
      %s201 = scalar_select %p198, %s199, %s200
      %p204 = pneg %p198
      %p205 = scmp.eq.s32.totalorder %s16, 1
      %p206 = por %p204, %p205
      %p207 = scmp.ne.s32.totalorder %s199, %s202
      %p208 = scmp.eq.s32.totalorder %s16, 0
      %p209 = por %p207, %p208
      %p210 = scmp.ne.s32.totalorder %s199, %s202
      %p211 = scmp.eq.s32.totalorder %s21, 1
      %p212 = por %p210, %p211
      %p213 = scmp.ne.s32.totalorder %s202, %s203
      %p214 = scmp.eq.s32.totalorder %s21, 0
      %p215 = por %p213, %p214
      %p216 = scmp.ne.s32.totalorder %s202, %s203
      %p217 = scmp.eq.s32.totalorder %s22, 1
      %p218 = por %p216, %p217
      %p220 = scmp.ne.s32.totalorder %s203, %s219
      %p221 = scmp.eq.s32.totalorder %s22, 0
      %p222 = por %p220, %p221
      %p223 = scmp.le.s32.totalorder 1, %s16
      %p224 = scmp.lt.s32.totalorder %s16, 3
      %p225 = pnand %p223, %p224
      %p226 = pneg %p225
      // Predicated region
      $region9: #{cbam_pallas.1} parent=5 // pred_check
        _
      $region10: #{cbam_pallas.1} parent=5 // pred_check_branch
        %228 = sbr.rel (%p225) target = $region12
      $region11: #{cbam_pallas.1} parent=5 // pred_region
        %s229 = ssub.s32 %s16, 1
        // Predicated region
        $region13: #{cbam_pallas.1} parent=11 // pred_check
          %p230 = pneg %p63
        $region14: #{cbam_pallas.1} parent=11 // pred_check_branch
          %232 = sbr.rel (%p230) target = $region16
        $region15: #{cbam_pallas.1} parent=11 // pred_region
          _
        $region16: #{cbam_pallas.1} parent=11 // pred_fallthru
          _
        // Predicated region
        $region17: #{cbam_pallas.1} parent=11 // pred_check
          %p233 = pneg %p84
        $region18: #{cbam_pallas.1} parent=11 // pred_check_branch
          %235 = sbr.rel (%p233) target = $region20
        $region19: #{cbam_pallas.1} parent=11 // pred_region
          _
        $region20: #{cbam_pallas.1} parent=11 // pred_fallthru
          _
        // Predicated region
        $region21: #{cbam_pallas.1} parent=11 // pred_check
          %p236 = pneg %p105
        $region22: #{cbam_pallas.1} parent=11 // pred_check_branch
          %238 = sbr.rel (%p236) target = $region24
        $region23: #{cbam_pallas.1} parent=11 // pred_region
          _
        $region24: #{cbam_pallas.1} parent=11 // pred_fallthru
          _
        // Predicated region
        $region25: #{cbam_pallas.1} parent=11 // pred_check
          %p239 = pneg %p126
        $region26: #{cbam_pallas.1} parent=11 // pred_check_branch
          %241 = sbr.rel (%p239) target = $region28
        $region27: #{cbam_pallas.1} parent=11 // pred_region
          _
        $region28: #{cbam_pallas.1} parent=11 // pred_fallthru
          _
        // Predicated region
        $region29: #{cbam_pallas.1} parent=11 // pred_check
          %p242 = pneg %p147
        $region30: #{cbam_pallas.1} parent=11 // pred_check_branch
          %244 = sbr.rel (%p242) target = $region32
        $region31: #{cbam_pallas.1} parent=11 // pred_region
          _
        $region32: #{cbam_pallas.1} parent=11 // pred_fallthru
          _
        // Predicated region
        $region33: #{cbam_pallas.1} parent=11 // pred_check
          %p245 = pneg %p168
        $region34: #{cbam_pallas.1} parent=11 // pred_check_branch
          %247 = sbr.rel (%p245) target = $region36
        $region35: #{cbam_pallas.1} parent=11 // pred_region
          %s249 = ssub.s32 16, 16
          %250 = vsyncadd [#allocation5], %s249
          %s252 = sshll.u32 %s6, 4
          %s253 = int_to_ptr.vmem [resolvable:$true] %s252
          %255 = dma.vmem_to_smem %s253, 16, [#allocation4], [#allocation5]
        $region36: #{cbam_pallas.1} parent=11 // pred_fallthru
          _
        // Predicated region
        $region37: #{cbam_pallas.1} parent=11 // pred_check
          %p256 = pneg %p189
        $region38: #{cbam_pallas.1} parent=11 // pred_check_branch
          %258 = sbr.rel (%p256) target = $region40
        $region39: #{cbam_pallas.1} parent=11 // pred_region
          _
        $region40: #{cbam_pallas.1} parent=11 // pred_fallthru
          _
      $region12: #{cbam_pallas.1} parent=5 // pred_fallthru
        _
      %p259 = scmp.lt.s32.totalorder %s16, 2
      // Predicated region
      $region41: #{cbam_pallas.1} parent=5 // pred_check
        %p260 = pneg %p259
      $region42: #{cbam_pallas.1} parent=5 // pred_check_branch
        %262 = sbr.rel (%p260) target = $region44
      $region43: #{cbam_pallas.1} parent=5 // pred_region
        // Predicated region
        $region45: #{cbam_pallas.1} parent=43 // pred_check
          %p263 = pneg %p36
        $region46: #{cbam_pallas.1} parent=43 // pred_check_branch
          %265 = sbr.rel (%p263) target = $region48
        $region47: #{cbam_pallas.1} parent=43 // pred_region
          %p266 = scmp.lt.s32.totalorder %s16, 1
          %s267 = scalar_select %p266, %s16, 1
          %s268 = smul.addr %s267, 32
          %s269 = smul.addr %s268, 8
          %s270 = scalar_lea.vmem %s0, %s269
        $region48: #{cbam_pallas.1} parent=43 // pred_fallthru
          _
      $region44: #{cbam_pallas.1} parent=5 // pred_fallthru
        _
      %p271 = scmp.le.s32.totalorder 1, %s16
      %p272 = scmp.lt.s32.totalorder %s16, 3
      %p273 = pnand %p271, %p272
      %p274 = pneg %p273
      // Predicated region
      $region49: #{cbam_pallas.1} parent=5 // pred_check
        _
      $region50: #{cbam_pallas.1} parent=5 // pred_check_branch
        %276 = sbr.rel (%p273) target = $region52
      $region51: #{cbam_pallas.1} parent=5 // pred_region
        %s277 = ssub.s32 %s16, 1
        // Predicated region
        $region53: #{cbam_pallas.1} parent=51 // pred_check
          %p278 = pneg %p168
        $region54: #{cbam_pallas.1} parent=51 // pred_check_branch
          %280 = sbr.rel (%p278) target = $region56
        $region55: #{cbam_pallas.1} parent=51 // pred_region
          %281 = dma.done [#allocation5], 16
        $region56: #{cbam_pallas.1} parent=51 // pred_fallthru
          _
        %282 = sfence
        %p283 = scmp.lt.s32.totalorder %s21, 1
        %s284 = scalar_select %p283, %s21, 1
        %s285 = smul.addr %s284, 32
        %s286 = smul.addr %s285, 8
        %s287 = scalar_lea.vmem %s0, %s286
        %p288 = pneg %p42
        %p289 = pneg %p39
        %p290 = pneg %p63
        %p291 = pneg %p60
        %p292 = pneg %p84
        %p293 = pneg %p81
        %p294 = pneg %p105
        %p295 = pneg %p102
        %p296 = pneg %p126
        %p297 = pneg %p123
        %p298 = pneg %p147
        %p299 = pneg %p144
        %p300 = pneg %p168
        %p301 = pneg %p165
        %p302 = pneg %p189
        %p303 = pneg %p186
        %p304 = pneg %p215
        %p305 = pneg %p212
        %p306 = scmp.lt.s32.totalorder %s21, 1
        %s307 = scalar_select %p306, %s21, 1
        %s308 = smul.addr %s307, 32
        %s309 = smul.addr %s308, 8
        %s310 = scalar_lea.vmem %s8, %s309
        %p311 = scmp.lt.s32.totalorder %s21, 1
        %s312 = scalar_select %p311, %s21, 1
        %s313 = smul.addr %s312, 32
        %s314 = smul.addr %s313, 8
        %s315 = scalar_lea.vmem %s0, %s314
        %p316 = scmp.lt.s32.totalorder %s21, 1
        %s317 = scalar_select %p316, %s21, 1
        %s318 = smul.addr %s317, 32
        %s319 = smul.addr %s318, 8
        %s320 = scalar_lea.vmem %s8, %s319
        %v321 = vld [vmem:[%s315] sm:$0xff]
        %v322 = vld [vmem:[%s315 + $0x8] sm:$0xff]
        %v323 = vld [vmem:[%s315 + $0x10] sm:$0xff]
        %v324 = vld [vmem:[%s315 + $0x18] sm:$0xff]
        %v325 = vld [vmem:[%s315 + $0x20] sm:$0xff]
        %v326 = vld [vmem:[%s315 + $0x28] sm:$0xff]
        %v327 = vld [vmem:[%s315 + $0x30] sm:$0xff]
        %v328 = vld [vmem:[%s315 + $0x38] sm:$0xff]
        %v329 = vld [vmem:[%s315 + $0x40] sm:$0xff]
        %v330 = vld [vmem:[%s315 + $0x48] sm:$0xff]
        %v331 = vld [vmem:[%s315 + $0x50] sm:$0xff]
        %v332 = vld [vmem:[%s315 + $0x58] sm:$0xff]
        %v333 = vld [vmem:[%s315 + $0x60] sm:$0xff]
        %v334 = vld [vmem:[%s315 + $0x68] sm:$0xff]
        %v335 = vld [vmem:[%s315 + $0x70] sm:$0xff]
        %v336 = vld [vmem:[%s315 + $0x78] sm:$0xff]
        %v337 = vld [vmem:[%s315 + $0x80] sm:$0xff]
        %v338 = vld [vmem:[%s315 + $0x88] sm:$0xff]
        %v339 = vld [vmem:[%s315 + $0x90] sm:$0xff]
        %v340 = vld [vmem:[%s315 + $0x98] sm:$0xff]
        %v341 = vld [vmem:[%s315 + $0xa0] sm:$0xff]
        %v342 = vld [vmem:[%s315 + $0xa8] sm:$0xff]
        %v343 = vld [vmem:[%s315 + $0xb0] sm:$0xff]
        %v344 = vld [vmem:[%s315 + $0xb8] sm:$0xff]
        %v345 = vld [vmem:[%s315 + $0xc0] sm:$0xff]
        %v346 = vld [vmem:[%s315 + $0xc8] sm:$0xff]
        %v347 = vld [vmem:[%s315 + $0xd0] sm:$0xff]
        %v348 = vld [vmem:[%s315 + $0xd8] sm:$0xff]
        %v349 = vld [vmem:[%s315 + $0xe0] sm:$0xff]
        %v350 = vld [vmem:[%s315 + $0xe8] sm:$0xff]
        %v351 = vld [vmem:[%s315 + $0xf0] sm:$0xff]
        %v352 = vld [vmem:[%s315 + $0xf8] sm:$0xff]
        %v353 = vadd.f32 %v321, %v322
        %354 = vadd.xlane.f32.xlu0 %v353
        %v355 = vpop.xlane.xlu0 %354
        %v356 = vadd.f32 %v323, %v324
        %357 = vadd.xlane.f32.xlu0 %v356
        %v358 = vpop.xlane.xlu0 %357
        %v359 = vadd.f32 %v325, %v326
        %360 = vadd.xlane.f32.xlu0 %v359
        %v361 = vpop.xlane.xlu0 %360
        %v362 = vadd.f32 %v327, %v328
        %363 = vadd.xlane.f32.xlu0 %v362
        %v364 = vpop.xlane.xlu0 %363
        %v365 = vadd.f32 %v329, %v330
        %366 = vadd.xlane.f32.xlu0 %v365
        %v367 = vpop.xlane.xlu0 %366
        %v368 = vadd.f32 %v331, %v332
        %369 = vadd.xlane.f32.xlu0 %v368
        %v370 = vpop.xlane.xlu0 %369
        %v371 = vadd.f32 %v333, %v334
        %372 = vadd.xlane.f32.xlu0 %v371
        %v373 = vpop.xlane.xlu0 %372
        %v374 = vadd.f32 %v335, %v336
        %375 = vadd.xlane.f32.xlu0 %v374
        %v376 = vpop.xlane.xlu0 %375
        %v377 = vadd.f32 %v337, %v338
        %378 = vadd.xlane.f32.xlu0 %v377
        %v379 = vpop.xlane.xlu0 %378
        %v380 = vadd.f32 %v339, %v340
        %381 = vadd.xlane.f32.xlu0 %v380
        %v382 = vpop.xlane.xlu0 %381
        %v383 = vadd.f32 %v341, %v342
        %384 = vadd.xlane.f32.xlu0 %v383
        %v385 = vpop.xlane.xlu0 %384
        %v386 = vadd.f32 %v343, %v344
        %387 = vadd.xlane.f32.xlu0 %v386
        %v388 = vpop.xlane.xlu0 %387
        %v389 = vadd.f32 %v345, %v346
        %390 = vadd.xlane.f32.xlu0 %v389
        %v391 = vpop.xlane.xlu0 %390
        %v392 = vadd.f32 %v347, %v348
        %393 = vadd.xlane.f32.xlu0 %v392
        %v394 = vpop.xlane.xlu0 %393
        %v395 = vadd.f32 %v349, %v350
        %396 = vadd.xlane.f32.xlu0 %v395
        %v397 = vpop.xlane.xlu0 %396
        %v398 = vadd.f32 %v351, %v352
        %399 = vadd.xlane.f32.xlu0 %v398
        %v400 = vpop.xlane.xlu0 %399
        %v401 = vrcp.pop 256.0
        %v402 = vmul.f32 %v355, %v401
        %v403 = vmul.f32 %v358, %v401
        %v404 = vmul.f32 %v361, %v401
        %v405 = vmul.f32 %v364, %v401
        %v406 = vmul.f32 %v367, %v401
        %v407 = vmul.f32 %v370, %v401
        %v408 = vmul.f32 %v373, %v401
        %v409 = vmul.f32 %v376, %v401
        %v410 = vmul.f32 %v379, %v401
        %v411 = vmul.f32 %v382, %v401
        %v412 = vmul.f32 %v385, %v401
        %v413 = vmul.f32 %v388, %v401
        %v414 = vmul.f32 %v391, %v401
        %v415 = vmul.f32 %v394, %v401
        %v416 = vmul.f32 %v397, %v401
        %v417 = vmul.f32 %v400, %v401
        %v418 = vld [vmem:[%s1] sm:$0xff]
        %v419 = vld [vmem:[%s2] sm:$0xff]
        %420 = vmatprep.subr.mxu0 0.0
        %421 = vmatpush1.msra.mxu0 %v402
        %422 = vmatprep.subr.mxu0 0.0
        %423 = vmatpush1.msra.mxu0 %v403
        %424 = vmatprep.subr.mxu0 0.0
        %425 = vmatpush1.msra.mxu0 %v404
        %426 = vmatprep.subr.mxu0 0.0
        %427 = vmatpush1.msra.mxu0 %v405
        %428 = vmatprep.subr.mxu0 0.0
        %429 = vmatpush1.msra.mxu0 %v406
        %430 = vmatprep.subr.mxu0 0.0
        %431 = vmatpush1.msra.mxu0 %v407
        %432 = vmatprep.subr.mxu0 0.0
        %433 = vmatpush1.msra.mxu0 %v408
        %434 = vmatprep.subr.mxu0 0.0
        %435 = vmatpush1.msra.mxu0 %v409
        %436 = vmatprep.subr.mxu0 0.0
        %437 = vmatpush1.msra.mxu0 %v410
        %438 = vmatprep.subr.mxu0 0.0
        %439 = vmatpush1.msra.mxu0 %v411
        %440 = vmatprep.subr.mxu0 0.0
        %441 = vmatpush1.msra.mxu0 %v412
        %442 = vmatprep.subr.mxu0 0.0
        %443 = vmatpush1.msra.mxu0 %v413
        %444 = vmatprep.subr.mxu0 0.0
        %445 = vmatpush1.msra.mxu0 %v414
        %446 = vmatprep.subr.mxu0 0.0
        %447 = vmatpush1.msra.mxu0 %v415
        %448 = vmatprep.subr.mxu0 0.0
        %449 = vmatpush1.msra.mxu0 %v416
        %450 = vmatprep.subr.mxu0 0.0
        %451 = vmatpush1.msra.mxu0 %v417
        %452 = vmatprep.subr.mxu0 0.0
        %453 = vmatpush1.msra.mxu0 0.0
        %454 = vmatprep.subr.mxu0 0.0
        %455 = vmatpush1.msra.mxu0 0.0
        %456 = vmatprep.subr.mxu0 0.0
        %457 = vmatpush1.msra.mxu0 0.0
        %458 = vmatprep.subr.mxu0 0.0
        %459 = vmatpush1.msra.mxu0 0.0
        %460 = vmatprep.subr.mxu0 0.0
        %461 = vmatpush1.msra.mxu0 0.0
        %462 = vmatprep.subr.mxu0 0.0
        %463 = vmatpush1.msra.mxu0 0.0
        %464 = vmatprep.subr.mxu0 0.0
        %465 = vmatpush1.msra.mxu0 0.0
        %466 = vmatprep.subr.mxu0 0.0
        %467 = vmatpush1.msra.mxu0 0.0
        %468 = vmatprep.subr.mxu0 0.0
        %469 = vmatpush1.msra.mxu0 0.0
        %470 = vmatprep.subr.mxu0 0.0
        %471 = vmatpush1.msra.mxu0 0.0
        %472 = vmatprep.subr.mxu0 0.0
        %473 = vmatpush1.msra.mxu0 0.0
        %474 = vmatprep.subr.mxu0 0.0
        %475 = vmatpush1.msra.mxu0 0.0
        %476 = vmatprep.subr.mxu0 0.0
        %477 = vmatpush1.msra.mxu0 0.0
        %478 = vmatprep.subr.mxu0 0.0
        %479 = vmatpush1.msra.mxu0 0.0
        %480 = vmatprep.subr.mxu0 0.0
        %481 = vmatpush1.msra.mxu0 0.0
        %482 = vmatprep.subr.mxu0 0.0
        %483 = vmatpush1.msra.mxu0 0.0
        %484 = vmatprep.mubr.f32.mxu0 0.0
        %485 = vmatmul.mubr.f32.gmra.mrb[0].mxu0 %v418
        %v486 = vpop.f32.mrb[0].mxu0
        %v487 = vadd.f32 %v419, %v486
        %v488 = vpop.f32.mrb[0].mxu0
        %489 = vdwg.mxu0
        %v490 = vmax.f32 %v487, 0.0
        %v491 = vld [vmem:[%s3] sm:$0xff]
        %v492 = vld [vmem:[%s3 + $0x8] sm:$0xff]
        %v493 = vld [vmem:[%s3 + $0x10] sm:$0xff]
        %v494 = vld [vmem:[%s3 + $0x18] sm:$0xff]
        %v495 = vld [vmem:[%s3 + $0x20] sm:$0xff]
        %v496 = vld [vmem:[%s3 + $0x28] sm:$0xff]
        %v497 = vld [vmem:[%s3 + $0x30] sm:$0xff]
        %v498 = vld [vmem:[%s3 + $0x38] sm:$0xff]
        %v499 = vld [vmem:[%s3 + $0x40] sm:$0xff]
        %v500 = vld [vmem:[%s3 + $0x48] sm:$0xff]
        %v501 = vld [vmem:[%s3 + $0x50] sm:$0xff]
        %v502 = vld [vmem:[%s3 + $0x58] sm:$0xff]
        %v503 = vld [vmem:[%s3 + $0x60] sm:$0xff]
        %v504 = vld [vmem:[%s3 + $0x68] sm:$0xff]
        %v505 = vld [vmem:[%s3 + $0x70] sm:$0xff]
        %v506 = vld [vmem:[%s3 + $0x78] sm:$0xff]
        %v507 = vld [vmem:[%s4] sm:$0xff]
        %v508 = vld [vmem:[%s4 + $0x8] sm:$0xff]
        %v509 = vld [vmem:[%s4 + $0x10] sm:$0xff]
        %v510 = vld [vmem:[%s4 + $0x18] sm:$0xff]
        %v511 = vld [vmem:[%s4 + $0x20] sm:$0xff]
        %v512 = vld [vmem:[%s4 + $0x28] sm:$0xff]
        %v513 = vld [vmem:[%s4 + $0x30] sm:$0xff]
        %v514 = vld [vmem:[%s4 + $0x38] sm:$0xff]
        %v515 = vld [vmem:[%s4 + $0x40] sm:$0xff]
        %v516 = vld [vmem:[%s4 + $0x48] sm:$0xff]
        %v517 = vld [vmem:[%s4 + $0x50] sm:$0xff]
        %v518 = vld [vmem:[%s4 + $0x58] sm:$0xff]
        %v519 = vld [vmem:[%s4 + $0x60] sm:$0xff]
        %v520 = vld [vmem:[%s4 + $0x68] sm:$0xff]
        %v521 = vld [vmem:[%s4 + $0x70] sm:$0xff]
        %v522 = vld [vmem:[%s4 + $0x78] sm:$0xff]
        %vm523 = vcmask 64512
        %v525 = vsel %vm523, %v491, 0
        %v528 = vsel %vm523, %v492, 0
        %v531 = vsel %vm523, %v493, 0
        %v534 = vsel %vm523, %v494, 0
        %v537 = vsel %vm523, %v495, 0
        %v540 = vsel %vm523, %v496, 0
        %v543 = vsel %vm523, %v497, 0
        %v546 = vsel %vm523, %v498, 0
        %v549 = vsel %vm523, %v499, 0
        %v552 = vsel %vm523, %v500, 0
        %v555 = vsel %vm523, %v501, 0
        %v558 = vsel %vm523, %v502, 0
        %v561 = vsel %vm523, %v503, 0
        %v564 = vsel %vm523, %v504, 0
        %v567 = vsel %vm523, %v505, 0
        %v570 = vsel %vm523, %v506, 0
        %572 = vmatprep.subr.mxu0 0.0
        %573 = vmatpush1.msra.mxu0 %v490
        %574 = vmatprep.subr.mxu0 0.0
        %575 = vmatpush1.msra.mxu0 0.0
        %576 = vmatprep.subr.mxu0 0.0
        %577 = vmatpush1.msra.mxu0 0.0
        %578 = vmatprep.subr.mxu0 0.0
        %579 = vmatpush1.msra.mxu0 0.0
        %580 = vmatprep.subr.mxu0 0.0
        %581 = vmatpush1.msra.mxu0 0.0
        %582 = vmatprep.subr.mxu0 0.0
        %583 = vmatpush1.msra.mxu0 0.0
        %584 = vmatprep.subr.mxu0 0.0
        %585 = vmatpush1.msra.mxu0 0.0
        %586 = vmatprep.subr.mxu0 0.0
        %587 = vmatpush1.msra.mxu0 0.0
        %588 = vmatprep.subr.mxu0 0.0
        %589 = vmatpush1.msra.mxu0 0.0
        %590 = vmatprep.subr.mxu0 0.0
        %591 = vmatpush1.msra.mxu0 0.0
        %592 = vmatprep.subr.mxu0 0.0
        %593 = vmatpush1.msra.mxu0 0.0
        %594 = vmatprep.subr.mxu0 0.0
        %595 = vmatpush1.msra.mxu0 0.0
        %596 = vmatprep.subr.mxu0 0.0
        %597 = vmatpush1.msra.mxu0 0.0
        %598 = vmatprep.subr.mxu0 0.0
        %599 = vmatpush1.msra.mxu0 0.0
        %600 = vmatprep.subr.mxu0 0.0
        %601 = vmatpush1.msra.mxu0 0.0
        %602 = vmatprep.subr.mxu0 0.0
        %603 = vmatpush1.msra.mxu0 0.0
        %604 = vmatprep.subr.mxu0 0.0
        %605 = vmatpush1.msra.mxu0 0.0
        %606 = vmatprep.subr.mxu0 0.0
        %607 = vmatpush1.msra.mxu0 0.0
        %608 = vmatprep.subr.mxu0 0.0
        %609 = vmatpush1.msra.mxu0 0.0
        %610 = vmatprep.subr.mxu0 0.0
        %611 = vmatpush1.msra.mxu0 0.0
        %612 = vmatprep.subr.mxu0 0.0
        %613 = vmatpush1.msra.mxu0 0.0
        %614 = vmatprep.subr.mxu0 0.0
        %615 = vmatpush1.msra.mxu0 0.0
        %616 = vmatprep.subr.mxu0 0.0
        %617 = vmatpush1.msra.mxu0 0.0
        %618 = vmatprep.subr.mxu0 0.0
        %619 = vmatpush1.msra.mxu0 0.0
        %620 = vmatprep.subr.mxu0 0.0
        %621 = vmatpush1.msra.mxu0 0.0
        %622 = vmatprep.subr.mxu0 0.0
        %623 = vmatpush1.msra.mxu0 0.0
        %624 = vmatprep.subr.mxu0 0.0
        %625 = vmatpush1.msra.mxu0 0.0
        %626 = vmatprep.subr.mxu0 0.0
        %627 = vmatpush1.msra.mxu0 0.0
        %628 = vmatprep.subr.mxu0 0.0
        %629 = vmatpush1.msra.mxu0 0.0
        %630 = vmatprep.subr.mxu0 0.0
        %631 = vmatpush1.msra.mxu0 0.0
        %632 = vmatprep.subr.mxu0 0.0
        %633 = vmatpush1.msra.mxu0 0.0
        %634 = vmatprep.subr.mxu0 0.0
        %635 = vmatpush1.msra.mxu0 0.0
        %636 = vmatprep.mubr.f32.mxu0 0.0
        %637 = vmatmul.mubr.f32.gmra.mrb[0].mxu0 %v525
        %v638 = vpop.f32.mrb[0].mxu0
        %v639 = vadd.f32 %v507, %v638
        %v640 = vpop.f32.mrb[0].mxu0
        %641 = vmatprep.mubr.f32.mxu0 0.0
        %642 = vmatmul.mubr.f32.gmra.mrb[0].mxu0 %v528
        %v643 = vpop.f32.mrb[0].mxu0
        %v644 = vadd.f32 %v508, %v643
        %v645 = vpop.f32.mrb[0].mxu0
        %646 = vmatprep.mubr.f32.mxu0 0.0
        %647 = vmatmul.mubr.f32.gmra.mrb[0].mxu0 %v531
        %v648 = vpop.f32.mrb[0].mxu0
        %v649 = vadd.f32 %v509, %v648
        %v650 = vpop.f32.mrb[0].mxu0
        %651 = vmatprep.mubr.f32.mxu0 0.0
        %652 = vmatmul.mubr.f32.gmra.mrb[0].mxu0 %v534
        %v653 = vpop.f32.mrb[0].mxu0
        %v654 = vadd.f32 %v510, %v653
        %v655 = vpop.f32.mrb[0].mxu0
        %656 = vmatprep.mubr.f32.mxu0 0.0
        %657 = vmatmul.mubr.f32.gmra.mrb[0].mxu0 %v537
        %v658 = vpop.f32.mrb[0].mxu0
        %v659 = vadd.f32 %v511, %v658
        %v660 = vpop.f32.mrb[0].mxu0
        %661 = vmatprep.mubr.f32.mxu0 0.0
        %662 = vmatmul.mubr.f32.gmra.mrb[0].mxu0 %v540
        %v663 = vpop.f32.mrb[0].mxu0
        %v664 = vadd.f32 %v512, %v663
        %v665 = vpop.f32.mrb[0].mxu0
        %666 = vmatprep.mubr.f32.mxu0 0.0
        %667 = vmatmul.mubr.f32.gmra.mrb[0].mxu0 %v543
        %v668 = vpop.f32.mrb[0].mxu0
        %v669 = vadd.f32 %v513, %v668
        %v670 = vpop.f32.mrb[0].mxu0
        %671 = vmatprep.mubr.f32.mxu0 0.0
        %672 = vmatmul.mubr.f32.gmra.mrb[0].mxu0 %v546
        %v673 = vpop.f32.mrb[0].mxu0
        %v674 = vadd.f32 %v514, %v673
        %v675 = vpop.f32.mrb[0].mxu0
        %676 = vmatprep.mubr.f32.mxu0 0.0
        %677 = vmatmul.mubr.f32.gmra.mrb[0].mxu0 %v549
        %v678 = vpop.f32.mrb[0].mxu0
        %v679 = vadd.f32 %v515, %v678
        %v680 = vpop.f32.mrb[0].mxu0
        %681 = vmatprep.mubr.f32.mxu0 0.0
        %682 = vmatmul.mubr.f32.gmra.mrb[0].mxu0 %v552
        %v683 = vpop.f32.mrb[0].mxu0
        %v684 = vadd.f32 %v516, %v683
        %v685 = vpop.f32.mrb[0].mxu0
        %686 = vmatprep.mubr.f32.mxu0 0.0
        %687 = vmatmul.mubr.f32.gmra.mrb[0].mxu0 %v555
        %v688 = vpop.f32.mrb[0].mxu0
        %v689 = vadd.f32 %v517, %v688
        %v690 = vpop.f32.mrb[0].mxu0
        %691 = vmatprep.mubr.f32.mxu0 0.0
        %692 = vmatmul.mubr.f32.gmra.mrb[0].mxu0 %v558
        %v693 = vpop.f32.mrb[0].mxu0
        %v694 = vadd.f32 %v518, %v693
        %v695 = vpop.f32.mrb[0].mxu0
        %696 = vmatprep.mubr.f32.mxu0 0.0
        %697 = vmatmul.mubr.f32.gmra.mrb[0].mxu0 %v561
        %v698 = vpop.f32.mrb[0].mxu0
        %v699 = vadd.f32 %v519, %v698
        %v700 = vpop.f32.mrb[0].mxu0
        %701 = vmatprep.mubr.f32.mxu0 0.0
        %702 = vmatmul.mubr.f32.gmra.mrb[0].mxu0 %v564
        %v703 = vpop.f32.mrb[0].mxu0
        %v704 = vadd.f32 %v520, %v703
        %v705 = vpop.f32.mrb[0].mxu0
        %706 = vmatprep.mubr.f32.mxu0 0.0
        %707 = vmatmul.mubr.f32.gmra.mrb[0].mxu0 %v567
        %v708 = vpop.f32.mrb[0].mxu0
        %v709 = vadd.f32 %v521, %v708
        %v710 = vpop.f32.mrb[0].mxu0
        %711 = vmatprep.mubr.f32.mxu0 0.0
        %712 = vmatmul.mubr.f32.gmra.mrb[0].mxu0 %v570
        %v713 = vpop.f32.mrb[0].mxu0
        %v714 = vadd.f32 %v522, %v713
        %v715 = vpop.f32.mrb[0].mxu0
        %716 = vdwg.mxu0
        %v717 = vxor.u32 %v639, 2147483648
        %v718 = vxor.u32 %v644, 2147483648
        %v719 = vxor.u32 %v649, 2147483648
        %v720 = vxor.u32 %v654, 2147483648
        %v721 = vxor.u32 %v659, 2147483648
        %v722 = vxor.u32 %v664, 2147483648
        %v723 = vxor.u32 %v669, 2147483648
        %v724 = vxor.u32 %v674, 2147483648
        %v725 = vxor.u32 %v679, 2147483648
        %v726 = vxor.u32 %v684, 2147483648
        %v727 = vxor.u32 %v689, 2147483648
        %v728 = vxor.u32 %v694, 2147483648
        %v729 = vxor.u32 %v699, 2147483648
        %v730 = vxor.u32 %v704, 2147483648
        %v731 = vxor.u32 %v709, 2147483648
        %v732 = vxor.u32 %v714, 2147483648
        %v733 = vmul.f32 %v717, 1.442695
        %v734 = vpow.pop %v733
        %v735 = vmul.f32 %v718, 1.442695
        %v736 = vpow.pop %v735
        %v737 = vmul.f32 %v719, 1.442695
        %v738 = vpow.pop %v737
        %v739 = vmul.f32 %v720, 1.442695
        %v740 = vpow.pop %v739
        %v741 = vmul.f32 %v721, 1.442695
        %v742 = vpow.pop %v741
        %v743 = vmul.f32 %v722, 1.442695
        %v744 = vpow.pop %v743
        %v745 = vmul.f32 %v723, 1.442695
        %v746 = vpow.pop %v745
        %v747 = vmul.f32 %v724, 1.442695
        %v748 = vpow.pop %v747
        %v749 = vmul.f32 %v725, 1.442695
        %v750 = vpow.pop %v749
        %v751 = vmul.f32 %v726, 1.442695
        %v752 = vpow.pop %v751
        %v753 = vmul.f32 %v727, 1.442695
        %v754 = vpow.pop %v753
        %v755 = vmul.f32 %v728, 1.442695
        %v756 = vpow.pop %v755
        %v757 = vmul.f32 %v729, 1.442695
        %v758 = vpow.pop %v757
        %v759 = vmul.f32 %v730, 1.442695
        %v760 = vpow.pop %v759
        %v761 = vmul.f32 %v731, 1.442695
        %v762 = vpow.pop %v761
        %v763 = vmul.f32 %v732, 1.442695
        %v764 = vpow.pop %v763
        %v765 = vadd.f32 %v734, 1.0
        %v766 = vadd.f32 %v736, 1.0
        %v767 = vadd.f32 %v738, 1.0
        %v768 = vadd.f32 %v740, 1.0
        %v769 = vadd.f32 %v742, 1.0
        %v770 = vadd.f32 %v744, 1.0
        %v771 = vadd.f32 %v746, 1.0
        %v772 = vadd.f32 %v748, 1.0
        %v773 = vadd.f32 %v750, 1.0
        %v774 = vadd.f32 %v752, 1.0
        %v775 = vadd.f32 %v754, 1.0
        %v776 = vadd.f32 %v756, 1.0
        %v777 = vadd.f32 %v758, 1.0
        %v778 = vadd.f32 %v760, 1.0
        %v779 = vadd.f32 %v762, 1.0
        %v780 = vadd.f32 %v764, 1.0
        %v781 = vrcp.pop %v765
        %v782 = vmul.f32 1.0, %v781
        %v783 = vrcp.pop %v766
        %v784 = vmul.f32 1.0, %v783
        %v785 = vrcp.pop %v767
        %v786 = vmul.f32 1.0, %v785
        %v787 = vrcp.pop %v768
        %v788 = vmul.f32 1.0, %v787
        %v789 = vrcp.pop %v769
        %v790 = vmul.f32 1.0, %v789
        %v791 = vrcp.pop %v770
        %v792 = vmul.f32 1.0, %v791
        %v793 = vrcp.pop %v771
        %v794 = vmul.f32 1.0, %v793
        %v795 = vrcp.pop %v772
        %v796 = vmul.f32 1.0, %v795
        %v797 = vrcp.pop %v773
        %v798 = vmul.f32 1.0, %v797
        %v799 = vrcp.pop %v774
        %v800 = vmul.f32 1.0, %v799
        %v801 = vrcp.pop %v775
        %v802 = vmul.f32 1.0, %v801
        %v803 = vrcp.pop %v776
        %v804 = vmul.f32 1.0, %v803
        %v805 = vrcp.pop %v777
        %v806 = vmul.f32 1.0, %v805
        %v807 = vrcp.pop %v778
        %v808 = vmul.f32 1.0, %v807
        %v809 = vrcp.pop %v779
        %v810 = vmul.f32 1.0, %v809
        %v811 = vrcp.pop %v780
        %v812 = vmul.f32 1.0, %v811
        %814 = vset.pattern.permute.xlu0 0
        %815 = vperm.xlu0 %814, %v782
        %v816 = vpop.permute.xlu0 %815
        %819 = vset.pattern.permute.xlu0 0
        %820 = vperm.xlu0 %819, %v784
        %v821 = vpop.permute.xlu0 %820
        %824 = vset.pattern.permute.xlu0 0
        %825 = vperm.xlu0 %824, %v786
        %v826 = vpop.permute.xlu0 %825
        %829 = vset.pattern.permute.xlu0 0
        %830 = vperm.xlu0 %829, %v788
        %v831 = vpop.permute.xlu0 %830
        %834 = vset.pattern.permute.xlu0 0
        %835 = vperm.xlu0 %834, %v790
        %v836 = vpop.permute.xlu0 %835
        %839 = vset.pattern.permute.xlu0 0
        %840 = vperm.xlu0 %839, %v792
        %v841 = vpop.permute.xlu0 %840
        %844 = vset.pattern.permute.xlu0 0
        %845 = vperm.xlu0 %844, %v794
        %v846 = vpop.permute.xlu0 %845
        %849 = vset.pattern.permute.xlu0 0
        %850 = vperm.xlu0 %849, %v796
        %v851 = vpop.permute.xlu0 %850
        %854 = vset.pattern.permute.xlu0 0
        %855 = vperm.xlu0 %854, %v798
        %v856 = vpop.permute.xlu0 %855
        %859 = vset.pattern.permute.xlu0 0
        %860 = vperm.xlu0 %859, %v800
        %v861 = vpop.permute.xlu0 %860
        %864 = vset.pattern.permute.xlu0 0
        %865 = vperm.xlu0 %864, %v802
        %v866 = vpop.permute.xlu0 %865
        %869 = vset.pattern.permute.xlu0 0
        %870 = vperm.xlu0 %869, %v804
        %v871 = vpop.permute.xlu0 %870
        %874 = vset.pattern.permute.xlu0 0
        %875 = vperm.xlu0 %874, %v806
        %v876 = vpop.permute.xlu0 %875
        %879 = vset.pattern.permute.xlu0 0
        %880 = vperm.xlu0 %879, %v808
        %v881 = vpop.permute.xlu0 %880
        %884 = vset.pattern.permute.xlu0 0
        %885 = vperm.xlu0 %884, %v810
        %v886 = vpop.permute.xlu0 %885
        %889 = vset.pattern.permute.xlu0 0
        %890 = vperm.xlu0 %889, %v812
        %v891 = vpop.permute.xlu0 %890
        %v893 = vmul.f32 %v321, %v816
        %v894 = vmul.f32 %v322, %v816
        %v895 = vmul.f32 %v323, %v821
        %v896 = vmul.f32 %v324, %v821
        %v897 = vmul.f32 %v325, %v826
        %v898 = vmul.f32 %v326, %v826
        %v899 = vmul.f32 %v327, %v831
        %v900 = vmul.f32 %v328, %v831
        %v901 = vmul.f32 %v329, %v836
        %v902 = vmul.f32 %v330, %v836
        %v903 = vmul.f32 %v331, %v841
        %v904 = vmul.f32 %v332, %v841
        %v905 = vmul.f32 %v333, %v846
        %v906 = vmul.f32 %v334, %v846
        %v907 = vmul.f32 %v335, %v851
        %v908 = vmul.f32 %v336, %v851
        %v909 = vmul.f32 %v337, %v856
        %v910 = vmul.f32 %v338, %v856
        %v911 = vmul.f32 %v339, %v861
        %v912 = vmul.f32 %v340, %v861
        %v913 = vmul.f32 %v341, %v866
        %v914 = vmul.f32 %v342, %v866
        %v915 = vmul.f32 %v343, %v871
        %v916 = vmul.f32 %v344, %v871
        %v917 = vmul.f32 %v345, %v876
        %v918 = vmul.f32 %v346, %v876
        %v919 = vmul.f32 %v347, %v881
        %v920 = vmul.f32 %v348, %v881
        %v921 = vmul.f32 %v349, %v886
        %v922 = vmul.f32 %v350, %v886
        %v923 = vmul.f32 %v351, %v891
        %v924 = vmul.f32 %v352, %v891
        %v925 = vmax.f32 %v893, %v897
        %v926 = vmax.f32 %v895, %v899
        %v927 = vmax.f32 %v925, %v901
        %v928 = vmax.f32 %v926, %v903
        %v929 = vmax.f32 %v927, %v905
        %v930 = vmax.f32 %v928, %v907
        %v931 = vmax.f32 %v929, %v909
        %v932 = vmax.f32 %v930, %v911
        %v933 = vmax.f32 %v931, %v913
        %v934 = vmax.f32 %v932, %v915
        %v935 = vmax.f32 %v933, %v917
        %v936 = vmax.f32 %v934, %v919
        %v937 = vmax.f32 %v935, %v921
        %v938 = vmax.f32 %v936, %v923
        %v939 = vmax.f32 %v937, %v938
        %v940 = vrot.slane %v939, 4
        %v941 = vmax.f32 %v939, %v940
        %v942 = vrot.slane %v941, 2
        %v943 = vmax.f32 %v941, %v942
        %v944 = vrot.slane %v943, 1
        %v945 = vmax.f32 %v943, %v944
        %v946 = vmax.f32 %v894, %v898
        %v947 = vmax.f32 %v896, %v900
        %v948 = vmax.f32 %v946, %v902
        %v949 = vmax.f32 %v947, %v904
        %v950 = vmax.f32 %v948, %v906
        %v951 = vmax.f32 %v949, %v908
        %v952 = vmax.f32 %v950, %v910
        %v953 = vmax.f32 %v951, %v912
        %v954 = vmax.f32 %v952, %v914
        %v955 = vmax.f32 %v953, %v916
        %v956 = vmax.f32 %v954, %v918
        %v957 = vmax.f32 %v955, %v920
        %v958 = vmax.f32 %v956, %v922
        %v959 = vmax.f32 %v957, %v924
        %v960 = vmax.f32 %v958, %v959
        %v961 = vrot.slane %v960, 4
        %v962 = vmax.f32 %v960, %v961
        %v963 = vrot.slane %v962, 2
        %v964 = vmax.f32 %v962, %v963
        %v965 = vrot.slane %v964, 1
        %v966 = vmax.f32 %v964, %v965
        %v967 = vadd.f32 %v893, %v895
        %v968 = vadd.f32 %v967, %v897
        %v969 = vadd.f32 %v968, %v899
        %v970 = vadd.f32 %v969, %v901
        %v971 = vadd.f32 %v970, %v903
        %v972 = vadd.f32 %v971, %v905
        %v973 = vadd.f32 %v972, %v907
        %v974 = vadd.f32 %v973, %v909
        %v975 = vadd.f32 %v974, %v911
        %v976 = vadd.f32 %v975, %v913
        %v977 = vadd.f32 %v976, %v915
        %v978 = vadd.f32 %v977, %v917
        %v979 = vadd.f32 %v978, %v919
        %v980 = vadd.f32 %v979, %v921
        %v981 = vadd.f32 %v980, %v923
        %v982 = vrot.slane %v981, 4
        %v983 = vadd.f32 %v981, %v982
        %v984 = vrot.slane %v983, 2
        %v985 = vadd.f32 %v983, %v984
        %v986 = vrot.slane %v985, 1
        %v987 = vadd.f32 %v985, %v986
        %v988 = vadd.f32 %v894, %v896
        %v989 = vadd.f32 %v988, %v898
        %v990 = vadd.f32 %v989, %v900
        %v991 = vadd.f32 %v990, %v902
        %v992 = vadd.f32 %v991, %v904
        %v993 = vadd.f32 %v992, %v906
        %v994 = vadd.f32 %v993, %v908
        %v995 = vadd.f32 %v994, %v910
        %v996 = vadd.f32 %v995, %v912
        %v997 = vadd.f32 %v996, %v914
        %v998 = vadd.f32 %v997, %v916
        %v999 = vadd.f32 %v998, %v918
        %v1000 = vadd.f32 %v999, %v920
        %v1001 = vadd.f32 %v1000, %v922
        %v1002 = vadd.f32 %v1001, %v924
        %v1003 = vrot.slane %v1002, 4
        %v1004 = vadd.f32 %v1002, %v1003
        %v1005 = vrot.slane %v1004, 2
        %v1006 = vadd.f32 %v1004, %v1005
        %v1007 = vrot.slane %v1006, 1
        %v1008 = vadd.f32 %v1006, %v1007
        %v1009 = vmul.f32 %v987, 0.0078125
        %v1010 = vmul.f32 %v1008, 0.0078125
        %1011 = vst [vmem:[#allocation2] sm:$0x3f] 0.0
        %v1014 = vcombine.low %v945, %v966
        %v1016 = vunpack.c.l.s4 1966171168
        %v1017 = vunpack.c.0.s8 %v1016
        %v1018 = vlaneseq
        %v1019 = vshrl.u32 %v1018, 7
        %v1020 = vsub.s32 %v1017, %v1019
        %v1021 = vrot.slane %v1014, %v1020
        %v1023 = vunpack.c.l.s4 1966171168
        %v1024 = vunpack.c.0.s8 %v1023
        %v1025 = vlaneseq
        %v1026 = vshrl.u32 %v1025, 7
        %v1027 = vsub.s32 %v1024, %v1026
        %v1028 = vrot.slane %v1021, %v1027
        %1029 = vrot.lane.b32.xlu0 %v1028, 51
        %v1030 = vpop.permute.xlu0 %1029
        %v1031 = vrot.slane %v1030, 7
        %vm1032 = vcmask 416768
        %v1033 = vsel %vm1032, %v1031, %v1030
        %v1035 = vlaneseq
        %vm1036 = vcmp.ge.s32.totalorder %v1035, 51
        %vm1037 = vcmp.lt.s32.totalorder %v1035, 307
        %vm1038 = vmand %vm1036, %vm1037
        %1039 = vst.msk [vmem:[#allocation2] ss:$2 sm:$0x7] %vm1038, %v1033
        %v1042 = vcombine.low %v1009, %v1010
        %v1044 = vunpack.c.l.s4 1966171168
        %v1045 = vunpack.c.0.s8 %v1044
        %v1046 = vlaneseq
        %v1047 = vshrl.u32 %v1046, 7
        %v1048 = vsub.s32 %v1045, %v1047
        %v1049 = vrot.slane %v1042, %v1048
        %v1051 = vunpack.c.l.s4 1966171168
        %v1052 = vunpack.c.0.s8 %v1051
        %v1053 = vlaneseq
        %v1054 = vshrl.u32 %v1053, 7
        %v1055 = vsub.s32 %v1052, %v1054
        %v1056 = vrot.slane %v1049, %v1055
        %1057 = vrot.lane.b32.xlu0 %v1056, 51
        %v1058 = vpop.permute.xlu0 %1057
        %v1059 = vrot.slane %v1058, 7
        %v1060 = vsel %vm1032, %v1059, %v1058
        %s1062 = scalar_lea.vmem [#allocation2], 1
        %1063 = vst.msk [vmem:[%s1062] ss:$2 sm:$0x7] %vm1038, %v1060
        %v1064 = vld [vmem:[%s5] sm:$0x3]
        %s1065 = sld [smem:[#allocation4]]
        %v1066 = vld [vmem:[#allocation2] ss:$2 sm:$0x3]
        %v1067 = vstv %s1065
        %v1068 = vmul.f32 %v1067, %v1066
        %s1069 = sld [smem:[#allocation4 + $0x31]]
        %s1070 = scalar_lea.vmem [#allocation2], 1
        %v1071 = vld [vmem:[%s1070] ss:$2 sm:$0x3]
        %v1072 = vstv %s1069
        %v1073 = vmul.f32 %v1072, %v1071
        %v1074 = vadd.f32 %v1068, %v1073
        %s1075 = sld [smem:[#allocation4 + $0x7]]
        %v1076 = vld [vmem:[#allocation2] ss:$2 sm:$0x7]
        %v1077 = vstv %s1075
        %v1078 = vmul.f32 %v1077, %v1076
        %s1079 = sld [smem:[#allocation4 + $0x38]]
        %v1080 = vld [vmem:[%s1062] ss:$2 sm:$0x7]
        %v1081 = vstv %s1079
        %v1082 = vmul.f32 %v1081, %v1080
        %v1083 = vadd.f32 %v1078, %v1082
        %1085 = vrot.lane.b32.xlu0 %v1083, 112
        %v1086 = vpop.permute.xlu0 %1085
        %v1087 = vrot.slane %v1086, 1
        %vm1088 = vcmask 916480
        %v1089 = vsel %vm1088, %v1086, %v1087
        %v1091 = vadd.f32 %v1074, %v1089
        %s1092 = sld [smem:[#allocation4 + $0xe]]
        %v1093 = vstv %s1092
        %v1094 = vmul.f32 %v1093, %v1076
        %s1095 = sld [smem:[#allocation4 + $0x3f]]
        %v1096 = vstv %s1095
        %v1097 = vmul.f32 %v1096, %v1080
        %v1098 = vadd.f32 %v1094, %v1097
        %1100 = vrot.lane.b32.xlu0 %v1098, 96
        %v1101 = vpop.permute.xlu0 %1100
        %v1102 = vrot.slane %v1101, 1
        %vm1103 = vcmask 785408
        %v1104 = vsel %vm1103, %v1101, %v1102
        %v1106 = vadd.f32 %v1091, %v1104
        %s1107 = sld [smem:[#allocation4 + $0x15]]
        %v1108 = vstv %s1107
        %v1109 = vmul.f32 %v1108, %v1076
        %s1110 = sld [smem:[#allocation4 + $0x46]]
        %v1111 = vstv %s1110
        %v1112 = vmul.f32 %v1111, %v1080
        %v1113 = vadd.f32 %v1109, %v1112
        %1115 = vrot.lane.b32.xlu0 %v1113, 80
        %v1116 = vpop.permute.xlu0 %1115
        %v1117 = vrot.slane %v1116, 1
        %vm1118 = vcmask 654336
        %v1119 = vsel %vm1118, %v1116, %v1117
        %v1121 = vadd.f32 %v1106, %v1119
        %s1122 = sld [smem:[#allocation4 + $0x1c]]
        %v1123 = vstv %s1122
        %v1124 = vmul.f32 %v1123, %v1076
        %s1125 = sld [smem:[#allocation4 + $0x4d]]
        %v1126 = vstv %s1125
        %v1127 = vmul.f32 %v1126, %v1080
        %v1128 = vadd.f32 %v1124, %v1127
        %1130 = vrot.lane.b32.xlu0 %v1128, 64
        %v1131 = vpop.permute.xlu0 %1130
        %v1132 = vrot.slane %v1131, 1
        %vm1133 = vcmask 523264
        %v1134 = vsel %vm1133, %v1131, %v1132
        %v1136 = vadd.f32 %v1121, %v1134
        %s1137 = sld [smem:[#allocation4 + $0x23]]
        %v1138 = vstv %s1137
        %v1139 = vmul.f32 %v1138, %v1076
        %s1140 = sld [smem:[#allocation4 + $0x54]]
        %v1141 = vstv %s1140
        %v1142 = vmul.f32 %v1141, %v1080
        %v1143 = vadd.f32 %v1139, %v1142
        %1145 = vrot.lane.b32.xlu0 %v1143, 48
        %v1146 = vpop.permute.xlu0 %1145
        %v1147 = vrot.slane %v1146, 1
        %vm1148 = vcmask 392192
        %v1149 = vsel %vm1148, %v1146, %v1147
        %v1151 = vadd.f32 %v1136, %v1149
        %s1152 = sld [smem:[#allocation4 + $0x2a]]
        %v1153 = vstv %s1152
        %v1154 = vmul.f32 %v1153, %v1076
        %s1155 = sld [smem:[#allocation4 + $0x5b]]
        %v1156 = vstv %s1155
        %v1157 = vmul.f32 %v1156, %v1080
        %v1158 = vadd.f32 %v1154, %v1157
        %1160 = vrot.lane.b32.xlu0 %v1158, 32
        %v1161 = vpop.permute.xlu0 %1160
        %v1162 = vrot.slane %v1161, 1
        %vm1163 = vcmask 261120
        %v1164 = vsel %vm1163, %v1161, %v1162
        %v1166 = vadd.f32 %v1151, %v1164
        %vm1167 = vcmp.ge.s32.totalorder %v1064, 3
        %vm1168 = vcmp.lt.s32.totalorder %v1064, 19
        %vm1169 = vmand %vm1167, %vm1168
        %v1170 = vsel %vm1169, %v1166, 0.0
        %s1171 = sld [smem:[#allocation4 + $0x1]]
        %v1172 = vstv %s1171
        %v1173 = vmul.f32 %v1172, %v1076
        %s1174 = sld [smem:[#allocation4 + $0x32]]
        %v1175 = vstv %s1174
        %v1176 = vmul.f32 %v1175, %v1080
        %v1177 = vadd.f32 %v1173, %v1176
        %s1178 = sld [smem:[#allocation4 + $0x8]]
        %v1179 = vstv %s1178
        %v1180 = vmul.f32 %v1179, %v1076
        %s1181 = sld [smem:[#allocation4 + $0x39]]
        %v1182 = vstv %s1181
        %v1183 = vmul.f32 %v1182, %v1080
        %v1184 = vadd.f32 %v1180, %v1183
        %1186 = vrot.lane.b32.xlu0 %v1184, 112
        %v1187 = vpop.permute.xlu0 %1186
        %v1188 = vrot.slane %v1187, 1
        %v1189 = vsel %vm1088, %v1187, %v1188
        %v1191 = vadd.f32 %v1177, %v1189
        %s1192 = sld [smem:[#allocation4 + $0xf]]
        %v1193 = vstv %s1192
        %v1194 = vmul.f32 %v1193, %v1076
        %s1195 = sld [smem:[#allocation4 + $0x40]]
        %v1196 = vstv %s1195
        %v1197 = vmul.f32 %v1196, %v1080
        %v1198 = vadd.f32 %v1194, %v1197
        %1200 = vrot.lane.b32.xlu0 %v1198, 96
        %v1201 = vpop.permute.xlu0 %1200
        %v1202 = vrot.slane %v1201, 1
        %v1203 = vsel %vm1103, %v1201, %v1202
        %v1205 = vadd.f32 %v1191, %v1203
        %s1206 = sld [smem:[#allocation4 + $0x16]]
        %v1207 = vstv %s1206
        %v1208 = vmul.f32 %v1207, %v1076
        %s1209 = sld [smem:[#allocation4 + $0x47]]
        %v1210 = vstv %s1209
        %v1211 = vmul.f32 %v1210, %v1080
        %v1212 = vadd.f32 %v1208, %v1211
        %1214 = vrot.lane.b32.xlu0 %v1212, 80
        %v1215 = vpop.permute.xlu0 %1214
        %v1216 = vrot.slane %v1215, 1
        %v1217 = vsel %vm1118, %v1215, %v1216
        %v1219 = vadd.f32 %v1205, %v1217
        %s1220 = sld [smem:[#allocation4 + $0x1d]]
        %v1221 = vstv %s1220
        %v1222 = vmul.f32 %v1221, %v1076
        %s1223 = sld [smem:[#allocation4 + $0x4e]]
        %v1224 = vstv %s1223
        %v1225 = vmul.f32 %v1224, %v1080
        %v1226 = vadd.f32 %v1222, %v1225
        %1228 = vrot.lane.b32.xlu0 %v1226, 64
        %v1229 = vpop.permute.xlu0 %1228
        %v1230 = vrot.slane %v1229, 1
        %v1231 = vsel %vm1133, %v1229, %v1230
        %v1233 = vadd.f32 %v1219, %v1231
        %s1234 = sld [smem:[#allocation4 + $0x24]]
        %v1235 = vstv %s1234
        %v1236 = vmul.f32 %v1235, %v1076
        %s1237 = sld [smem:[#allocation4 + $0x55]]
        %v1238 = vstv %s1237
        %v1239 = vmul.f32 %v1238, %v1080
        %v1240 = vadd.f32 %v1236, %v1239
        %1242 = vrot.lane.b32.xlu0 %v1240, 48
        %v1243 = vpop.permute.xlu0 %1242
        %v1244 = vrot.slane %v1243, 1
        %v1245 = vsel %vm1148, %v1243, %v1244
        %v1247 = vadd.f32 %v1233, %v1245
        %s1248 = sld [smem:[#allocation4 + $0x2b]]
        %v1249 = vstv %s1248
        %v1250 = vmul.f32 %v1249, %v1076
        %s1251 = sld [smem:[#allocation4 + $0x5c]]
        %v1252 = vstv %s1251
        %v1253 = vmul.f32 %v1252, %v1080
        %v1254 = vadd.f32 %v1250, %v1253
        %1256 = vrot.lane.b32.xlu0 %v1254, 32
        %v1257 = vpop.permute.xlu0 %1256
        %v1258 = vrot.slane %v1257, 1
        %v1259 = vsel %vm1163, %v1257, %v1258
        %v1261 = vadd.f32 %v1247, %v1259
        %vm1262 = vcmp.ge.s32.totalorder %v1064, 2
        %vm1263 = vcmp.lt.s32.totalorder %v1064, 18
        %vm1264 = vmand %vm1262, %vm1263
        %1266 = vrot.lane.b32.xlu0 %v1261, 127
        %v1267 = vpop.permute.xlu0 %1266
        %v1268 = vrot.slane %v1267, 1
        %vm1269 = vcmask 1039360
        %v1270 = vsel %vm1269, %v1267, %v1268
        %v1272 = vsel %vm1264, %v1270, 0.0
        %s1273 = sld [smem:[#allocation4 + $0x2]]
        %v1274 = vstv %s1273
        %v1275 = vmul.f32 %v1274, %v1076
        %s1276 = sld [smem:[#allocation4 + $0x33]]
        %v1277 = vstv %s1276
        %v1278 = vmul.f32 %v1277, %v1080
        %v1279 = vadd.f32 %v1275, %v1278
        %s1280 = sld [smem:[#allocation4 + $0x9]]
        %v1281 = vstv %s1280
        %v1282 = vmul.f32 %v1281, %v1076
        %s1283 = sld [smem:[#allocation4 + $0x3a]]
        %v1284 = vstv %s1283
        %v1285 = vmul.f32 %v1284, %v1080
        %v1286 = vadd.f32 %v1282, %v1285
        %1288 = vrot.lane.b32.xlu0 %v1286, 112
        %v1289 = vpop.permute.xlu0 %1288
        %v1290 = vrot.slane %v1289, 1
        %v1291 = vsel %vm1088, %v1289, %v1290
        %v1293 = vadd.f32 %v1279, %v1291
        %s1294 = sld [smem:[#allocation4 + $0x10]]
        %v1295 = vstv %s1294
        %v1296 = vmul.f32 %v1295, %v1076
        %s1297 = sld [smem:[#allocation4 + $0x41]]
        %v1298 = vstv %s1297
        %v1299 = vmul.f32 %v1298, %v1080
        %v1300 = vadd.f32 %v1296, %v1299
        %1302 = vrot.lane.b32.xlu0 %v1300, 96
        %v1303 = vpop.permute.xlu0 %1302
        %v1304 = vrot.slane %v1303, 1
        %v1305 = vsel %vm1103, %v1303, %v1304
        %v1307 = vadd.f32 %v1293, %v1305
        %s1308 = sld [smem:[#allocation4 + $0x17]]
        %v1309 = vstv %s1308
        %v1310 = vmul.f32 %v1309, %v1076
        %s1311 = sld [smem:[#allocation4 + $0x48]]
        %v1312 = vstv %s1311
        %v1313 = vmul.f32 %v1312, %v1080
        %v1314 = vadd.f32 %v1310, %v1313
        %1316 = vrot.lane.b32.xlu0 %v1314, 80
        %v1317 = vpop.permute.xlu0 %1316
        %v1318 = vrot.slane %v1317, 1
        %v1319 = vsel %vm1118, %v1317, %v1318
        %v1321 = vadd.f32 %v1307, %v1319
        %s1322 = sld [smem:[#allocation4 + $0x1e]]
        %v1323 = vstv %s1322
        %v1324 = vmul.f32 %v1323, %v1076
        %s1325 = sld [smem:[#allocation4 + $0x4f]]
        %v1326 = vstv %s1325
        %v1327 = vmul.f32 %v1326, %v1080
        %v1328 = vadd.f32 %v1324, %v1327
        %1330 = vrot.lane.b32.xlu0 %v1328, 64
        %v1331 = vpop.permute.xlu0 %1330
        %v1332 = vrot.slane %v1331, 1
        %v1333 = vsel %vm1133, %v1331, %v1332
        %v1335 = vadd.f32 %v1321, %v1333
        %s1336 = sld [smem:[#allocation4 + $0x25]]
        %v1337 = vstv %s1336
        %v1338 = vmul.f32 %v1337, %v1076
        %s1339 = sld [smem:[#allocation4 + $0x56]]
        %v1340 = vstv %s1339
        %v1341 = vmul.f32 %v1340, %v1080
        %v1342 = vadd.f32 %v1338, %v1341
        %1344 = vrot.lane.b32.xlu0 %v1342, 48
        %v1345 = vpop.permute.xlu0 %1344
        %v1346 = vrot.slane %v1345, 1
        %v1347 = vsel %vm1148, %v1345, %v1346
        %v1349 = vadd.f32 %v1335, %v1347
        %s1350 = sld [smem:[#allocation4 + $0x2c]]
        %v1351 = vstv %s1350
        %v1352 = vmul.f32 %v1351, %v1076
        %s1353 = sld [smem:[#allocation4 + $0x5d]]
        %v1354 = vstv %s1353
        %v1355 = vmul.f32 %v1354, %v1080
        %v1356 = vadd.f32 %v1352, %v1355
        %1358 = vrot.lane.b32.xlu0 %v1356, 32
        %v1359 = vpop.permute.xlu0 %1358
        %v1360 = vrot.slane %v1359, 1
        %v1361 = vsel %vm1163, %v1359, %v1360
        %v1363 = vadd.f32 %v1349, %v1361
        %vm1364 = vcmp.ge.s32.totalorder %v1064, 1
        %vm1365 = vcmp.lt.s32.totalorder %v1064, 17
        %vm1366 = vmand %vm1364, %vm1365
        %1368 = vrot.lane.b32.xlu0 %v1363, 126
        %v1369 = vpop.permute.xlu0 %1368
        %v1370 = vrot.slane %v1369, 1
        %vm1371 = vcmask 1031168
        %v1372 = vsel %vm1371, %v1369, %v1370
        %v1374 = vsel %vm1366, %v1372, 0.0
        %s1375 = sld [smem:[#allocation4 + $0x3]]
        %v1376 = vstv %s1375
        %v1377 = vmul.f32 %v1376, %v1076
        %s1378 = sld [smem:[#allocation4 + $0x34]]
        %v1379 = vstv %s1378
        %v1380 = vmul.f32 %v1379, %v1080
        %v1381 = vadd.f32 %v1377, %v1380
        %s1382 = sld [smem:[#allocation4 + $0xa]]
        %v1383 = vstv %s1382
        %v1384 = vmul.f32 %v1383, %v1076
        %s1385 = sld [smem:[#allocation4 + $0x3b]]
        %v1386 = vstv %s1385
        %v1387 = vmul.f32 %v1386, %v1080
        %v1388 = vadd.f32 %v1384, %v1387
        %1390 = vrot.lane.b32.xlu0 %v1388, 112
        %v1391 = vpop.permute.xlu0 %1390
        %v1392 = vrot.slane %v1391, 1
        %v1393 = vsel %vm1088, %v1391, %v1392
        %v1395 = vadd.f32 %v1381, %v1393
        %s1396 = sld [smem:[#allocation4 + $0x11]]
        %v1397 = vstv %s1396
        %v1398 = vmul.f32 %v1397, %v1076
        %s1399 = sld [smem:[#allocation4 + $0x42]]
        %v1400 = vstv %s1399
        %v1401 = vmul.f32 %v1400, %v1080
        %v1402 = vadd.f32 %v1398, %v1401
        %1404 = vrot.lane.b32.xlu0 %v1402, 96
        %v1405 = vpop.permute.xlu0 %1404
        %v1406 = vrot.slane %v1405, 1
        %v1407 = vsel %vm1103, %v1405, %v1406
        %v1409 = vadd.f32 %v1395, %v1407
        %s1410 = sld [smem:[#allocation4 + $0x18]]
        %v1411 = vstv %s1410
        %v1412 = vmul.f32 %v1411, %v1076
        %s1413 = sld [smem:[#allocation4 + $0x49]]
        %v1414 = vstv %s1413
        %v1415 = vmul.f32 %v1414, %v1080
        %v1416 = vadd.f32 %v1412, %v1415
        %1418 = vrot.lane.b32.xlu0 %v1416, 80
        %v1419 = vpop.permute.xlu0 %1418
        %v1420 = vrot.slane %v1419, 1
        %v1421 = vsel %vm1118, %v1419, %v1420
        %v1423 = vadd.f32 %v1409, %v1421
        %s1424 = sld [smem:[#allocation4 + $0x1f]]
        %v1425 = vstv %s1424
        %v1426 = vmul.f32 %v1425, %v1076
        %s1427 = sld [smem:[#allocation4 + $0x50]]
        %v1428 = vstv %s1427
        %v1429 = vmul.f32 %v1428, %v1080
        %v1430 = vadd.f32 %v1426, %v1429
        %1432 = vrot.lane.b32.xlu0 %v1430, 64
        %v1433 = vpop.permute.xlu0 %1432
        %v1434 = vrot.slane %v1433, 1
        %v1435 = vsel %vm1133, %v1433, %v1434
        %v1437 = vadd.f32 %v1423, %v1435
        %s1438 = sld [smem:[#allocation4 + $0x26]]
        %v1439 = vstv %s1438
        %v1440 = vmul.f32 %v1439, %v1076
        %s1441 = sld [smem:[#allocation4 + $0x57]]
        %v1442 = vstv %s1441
        %v1443 = vmul.f32 %v1442, %v1080
        %v1444 = vadd.f32 %v1440, %v1443
        %1446 = vrot.lane.b32.xlu0 %v1444, 48
        %v1447 = vpop.permute.xlu0 %1446
        %v1448 = vrot.slane %v1447, 1
        %v1449 = vsel %vm1148, %v1447, %v1448
        %v1451 = vadd.f32 %v1437, %v1449
        %s1452 = sld [smem:[#allocation4 + $0x2d]]
        %v1453 = vstv %s1452
        %v1454 = vmul.f32 %v1453, %v1076
        %s1455 = sld [smem:[#allocation4 + $0x5e]]
        %v1456 = vstv %s1455
        %v1457 = vmul.f32 %v1456, %v1080
        %v1458 = vadd.f32 %v1454, %v1457
        %1460 = vrot.lane.b32.xlu0 %v1458, 32
        %v1461 = vpop.permute.xlu0 %1460
        %v1462 = vrot.slane %v1461, 1
        %v1463 = vsel %vm1163, %v1461, %v1462
        %v1465 = vadd.f32 %v1451, %v1463
        %vm1466 = vcmp.ge.s32.totalorder %v1064, 0
        %vm1467 = vcmp.lt.s32.totalorder %v1064, 16
        %vm1468 = vmand %vm1466, %vm1467
        %1470 = vrot.lane.b32.xlu0 %v1465, 125
        %v1471 = vpop.permute.xlu0 %1470
        %v1472 = vrot.slane %v1471, 1
        %vm1473 = vcmask 1022976
        %v1474 = vsel %vm1473, %v1471, %v1472
        %v1476 = vsel %vm1468, %v1474, 0.0
        %s1477 = sld [smem:[#allocation4 + $0x4]]
        %v1478 = vstv %s1477
        %v1479 = vmul.f32 %v1478, %v1076
        %s1480 = sld [smem:[#allocation4 + $0x35]]
        %v1481 = vstv %s1480
        %v1482 = vmul.f32 %v1481, %v1080
        %v1483 = vadd.f32 %v1479, %v1482
        %s1484 = sld [smem:[#allocation4 + $0xb]]
        %v1485 = vstv %s1484
        %v1486 = vmul.f32 %v1485, %v1076
        %s1487 = sld [smem:[#allocation4 + $0x3c]]
        %v1488 = vstv %s1487
        %v1489 = vmul.f32 %v1488, %v1080
        %v1490 = vadd.f32 %v1486, %v1489
        %1492 = vrot.lane.b32.xlu0 %v1490, 112
        %v1493 = vpop.permute.xlu0 %1492
        %v1494 = vrot.slane %v1493, 1
        %v1495 = vsel %vm1088, %v1493, %v1494
        %v1497 = vadd.f32 %v1483, %v1495
        %s1498 = sld [smem:[#allocation4 + $0x12]]
        %v1499 = vstv %s1498
        %v1500 = vmul.f32 %v1499, %v1076
        %s1501 = sld [smem:[#allocation4 + $0x43]]
        %v1502 = vstv %s1501
        %v1503 = vmul.f32 %v1502, %v1080
        %v1504 = vadd.f32 %v1500, %v1503
        %1506 = vrot.lane.b32.xlu0 %v1504, 96
        %v1507 = vpop.permute.xlu0 %1506
        %v1508 = vrot.slane %v1507, 1
        %v1509 = vsel %vm1103, %v1507, %v1508
        %v1511 = vadd.f32 %v1497, %v1509
        %s1512 = sld [smem:[#allocation4 + $0x19]]
        %v1513 = vstv %s1512
        %v1514 = vmul.f32 %v1513, %v1076
        %s1515 = sld [smem:[#allocation4 + $0x4a]]
        %v1516 = vstv %s1515
        %v1517 = vmul.f32 %v1516, %v1080
        %v1518 = vadd.f32 %v1514, %v1517
        %1520 = vrot.lane.b32.xlu0 %v1518, 80
        %v1521 = vpop.permute.xlu0 %1520
        %v1522 = vrot.slane %v1521, 1
        %v1523 = vsel %vm1118, %v1521, %v1522
        %v1525 = vadd.f32 %v1511, %v1523
        %s1526 = sld [smem:[#allocation4 + $0x20]]
        %v1527 = vstv %s1526
        %v1528 = vmul.f32 %v1527, %v1076
        %s1529 = sld [smem:[#allocation4 + $0x51]]
        %v1530 = vstv %s1529
        %v1531 = vmul.f32 %v1530, %v1080
        %v1532 = vadd.f32 %v1528, %v1531
        %1534 = vrot.lane.b32.xlu0 %v1532, 64
        %v1535 = vpop.permute.xlu0 %1534
        %v1536 = vrot.slane %v1535, 1
        %v1537 = vsel %vm1133, %v1535, %v1536
        %v1539 = vadd.f32 %v1525, %v1537
        %s1540 = sld [smem:[#allocation4 + $0x27]]
        %v1541 = vstv %s1540
        %v1542 = vmul.f32 %v1541, %v1076
        %s1543 = sld [smem:[#allocation4 + $0x58]]
        %v1544 = vstv %s1543
        %v1545 = vmul.f32 %v1544, %v1080
        %v1546 = vadd.f32 %v1542, %v1545
        %1548 = vrot.lane.b32.xlu0 %v1546, 48
        %v1549 = vpop.permute.xlu0 %1548
        %v1550 = vrot.slane %v1549, 1
        %v1551 = vsel %vm1148, %v1549, %v1550
        %v1553 = vadd.f32 %v1539, %v1551
        %s1554 = sld [smem:[#allocation4 + $0x2e]]
        %v1555 = vstv %s1554
        %v1556 = vmul.f32 %v1555, %v1076
        %s1557 = sld [smem:[#allocation4 + $0x5f]]
        %v1558 = vstv %s1557
        %v1559 = vmul.f32 %v1558, %v1080
        %v1560 = vadd.f32 %v1556, %v1559
        %1562 = vrot.lane.b32.xlu0 %v1560, 32
        %v1563 = vpop.permute.xlu0 %1562
        %v1564 = vrot.slane %v1563, 1
        %v1565 = vsel %vm1163, %v1563, %v1564
        %v1567 = vadd.f32 %v1553, %v1565
        %vm1568 = vcmp.ge.s32.totalorder %v1064, 4294967295
        %vm1569 = vcmp.lt.s32.totalorder %v1064, 15
        %vm1570 = vmand %vm1568, %vm1569
        %1572 = vrot.lane.b32.xlu0 %v1567, 124
        %v1573 = vpop.permute.xlu0 %1572
        %v1574 = vrot.slane %v1573, 1
        %vm1575 = vcmask 1014784
        %v1576 = vsel %vm1575, %v1573, %v1574
        %v1578 = vsel %vm1570, %v1576, 0.0
        %s1579 = sld [smem:[#allocation4 + $0x5]]
        %v1580 = vstv %s1579
        %v1581 = vmul.f32 %v1580, %v1076
        %s1582 = sld [smem:[#allocation4 + $0x36]]
        %v1583 = vstv %s1582
        %v1584 = vmul.f32 %v1583, %v1080
        %v1585 = vadd.f32 %v1581, %v1584
        %s1586 = sld [smem:[#allocation4 + $0xc]]
        %v1587 = vstv %s1586
        %v1588 = vmul.f32 %v1587, %v1076
        %s1589 = sld [smem:[#allocation4 + $0x3d]]
        %v1590 = vstv %s1589
        %v1591 = vmul.f32 %v1590, %v1080
        %v1592 = vadd.f32 %v1588, %v1591
        %1594 = vrot.lane.b32.xlu0 %v1592, 112
        %v1595 = vpop.permute.xlu0 %1594
        %v1596 = vrot.slane %v1595, 1
        %v1597 = vsel %vm1088, %v1595, %v1596
        %v1599 = vadd.f32 %v1585, %v1597
        %s1600 = sld [smem:[#allocation4 + $0x13]]
        %v1601 = vstv %s1600
        %v1602 = vmul.f32 %v1601, %v1076
        %s1603 = sld [smem:[#allocation4 + $0x44]]
        %v1604 = vstv %s1603
        %v1605 = vmul.f32 %v1604, %v1080
        %v1606 = vadd.f32 %v1602, %v1605
        %1608 = vrot.lane.b32.xlu0 %v1606, 96
        %v1609 = vpop.permute.xlu0 %1608
        %v1610 = vrot.slane %v1609, 1
        %v1611 = vsel %vm1103, %v1609, %v1610
        %v1613 = vadd.f32 %v1599, %v1611
        %s1614 = sld [smem:[#allocation4 + $0x1a]]
        %v1615 = vstv %s1614
        %v1616 = vmul.f32 %v1615, %v1076
        %s1617 = sld [smem:[#allocation4 + $0x4b]]
        %v1618 = vstv %s1617
        %v1619 = vmul.f32 %v1618, %v1080
        %v1620 = vadd.f32 %v1616, %v1619
        %1622 = vrot.lane.b32.xlu0 %v1620, 80
        %v1623 = vpop.permute.xlu0 %1622
        %v1624 = vrot.slane %v1623, 1
        %v1625 = vsel %vm1118, %v1623, %v1624
        %v1627 = vadd.f32 %v1613, %v1625
        %s1628 = sld [smem:[#allocation4 + $0x21]]
        %v1629 = vstv %s1628
        %v1630 = vmul.f32 %v1629, %v1076
        %s1631 = sld [smem:[#allocation4 + $0x52]]
        %v1632 = vstv %s1631
        %v1633 = vmul.f32 %v1632, %v1080
        %v1634 = vadd.f32 %v1630, %v1633
        %1636 = vrot.lane.b32.xlu0 %v1634, 64
        %v1637 = vpop.permute.xlu0 %1636
        %v1638 = vrot.slane %v1637, 1
        %v1639 = vsel %vm1133, %v1637, %v1638
        %v1641 = vadd.f32 %v1627, %v1639
        %s1642 = sld [smem:[#allocation4 + $0x28]]
        %v1643 = vstv %s1642
        %v1644 = vmul.f32 %v1643, %v1076
        %s1645 = sld [smem:[#allocation4 + $0x59]]
        %v1646 = vstv %s1645
        %v1647 = vmul.f32 %v1646, %v1080
        %v1648 = vadd.f32 %v1644, %v1647
        %1650 = vrot.lane.b32.xlu0 %v1648, 48
        %v1651 = vpop.permute.xlu0 %1650
        %v1652 = vrot.slane %v1651, 1
        %v1653 = vsel %vm1148, %v1651, %v1652
        %v1655 = vadd.f32 %v1641, %v1653
        %s1656 = sld [smem:[#allocation4 + $0x2f]]
        %v1657 = vstv %s1656
        %v1658 = vmul.f32 %v1657, %v1076
        %s1659 = sld [smem:[#allocation4 + $0x60]]
        %v1660 = vstv %s1659
        %v1661 = vmul.f32 %v1660, %v1080
        %v1662 = vadd.f32 %v1658, %v1661
        %1664 = vrot.lane.b32.xlu0 %v1662, 32
        %v1665 = vpop.permute.xlu0 %1664
        %v1666 = vrot.slane %v1665, 1
        %v1667 = vsel %vm1163, %v1665, %v1666
        %v1669 = vadd.f32 %v1655, %v1667
        %vm1670 = vcmp.ge.s32.totalorder %v1064, 4294967294
        %vm1671 = vcmp.lt.s32.totalorder %v1064, 14
        %vm1672 = vmand %vm1670, %vm1671
        %1674 = vrot.lane.b32.xlu0 %v1669, 123
        %v1675 = vpop.permute.xlu0 %1674
        %v1676 = vrot.slane %v1675, 1
        %vm1677 = vcmask 1006592
        %v1678 = vsel %vm1677, %v1675, %v1676
        %v1680 = vsel %vm1672, %v1678, 0.0
        %s1681 = sld [smem:[#allocation4 + $0x6]]
        %v1682 = vstv %s1681
        %v1683 = vmul.f32 %v1682, %v1076
        %s1684 = sld [smem:[#allocation4 + $0x37]]
        %v1685 = vstv %s1684
        %v1686 = vmul.f32 %v1685, %v1080
        %v1687 = vadd.f32 %v1683, %v1686
        %s1688 = sld [smem:[#allocation4 + $0xd]]
        %v1689 = vstv %s1688
        %v1690 = vmul.f32 %v1689, %v1076
        %s1691 = sld [smem:[#allocation4 + $0x3e]]
        %v1692 = vstv %s1691
        %v1693 = vmul.f32 %v1692, %v1080
        %v1694 = vadd.f32 %v1690, %v1693
        %1696 = vrot.lane.b32.xlu0 %v1694, 112
        %v1697 = vpop.permute.xlu0 %1696
        %v1698 = vrot.slane %v1697, 1
        %v1699 = vsel %vm1088, %v1697, %v1698
        %v1701 = vadd.f32 %v1687, %v1699
        %s1702 = sld [smem:[#allocation4 + $0x14]]
        %v1703 = vstv %s1702
        %v1704 = vmul.f32 %v1703, %v1076
        %s1705 = sld [smem:[#allocation4 + $0x45]]
        %v1706 = vstv %s1705
        %v1707 = vmul.f32 %v1706, %v1080
        %v1708 = vadd.f32 %v1704, %v1707
        %1710 = vrot.lane.b32.xlu0 %v1708, 96
        %v1711 = vpop.permute.xlu0 %1710
        %v1712 = vrot.slane %v1711, 1
        %v1713 = vsel %vm1103, %v1711, %v1712
        %v1715 = vadd.f32 %v1701, %v1713
        %s1716 = sld [smem:[#allocation4 + $0x1b]]
        %v1717 = vstv %s1716
        %v1718 = vmul.f32 %v1717, %v1076
        %s1719 = sld [smem:[#allocation4 + $0x4c]]
        %v1720 = vstv %s1719
        %v1721 = vmul.f32 %v1720, %v1080
        %v1722 = vadd.f32 %v1718, %v1721
        %1724 = vrot.lane.b32.xlu0 %v1722, 80
        %v1725 = vpop.permute.xlu0 %1724
        %v1726 = vrot.slane %v1725, 1
        %v1727 = vsel %vm1118, %v1725, %v1726
        %v1729 = vadd.f32 %v1715, %v1727
        %s1730 = sld [smem:[#allocation4 + $0x22]]
        %v1731 = vstv %s1730
        %v1732 = vmul.f32 %v1731, %v1076
        %s1733 = sld [smem:[#allocation4 + $0x53]]
        %v1734 = vstv %s1733
        %v1735 = vmul.f32 %v1734, %v1080
        %v1736 = vadd.f32 %v1732, %v1735
        %1738 = vrot.lane.b32.xlu0 %v1736, 64
        %v1739 = vpop.permute.xlu0 %1738
        %v1740 = vrot.slane %v1739, 1
        %v1741 = vsel %vm1133, %v1739, %v1740
        %v1743 = vadd.f32 %v1729, %v1741
        %s1744 = sld [smem:[#allocation4 + $0x29]]
        %v1745 = vstv %s1744
        %v1746 = vmul.f32 %v1745, %v1076
        %s1747 = sld [smem:[#allocation4 + $0x5a]]
        %v1748 = vstv %s1747
        %v1749 = vmul.f32 %v1748, %v1080
        %v1750 = vadd.f32 %v1746, %v1749
        %1752 = vrot.lane.b32.xlu0 %v1750, 48
        %v1753 = vpop.permute.xlu0 %1752
        %v1754 = vrot.slane %v1753, 1
        %v1755 = vsel %vm1148, %v1753, %v1754
        %v1757 = vadd.f32 %v1743, %v1755
        %s1758 = sld [smem:[#allocation4 + $0x30]]
        %v1759 = vstv %s1758
        %v1760 = vmul.f32 %v1759, %v1076
        %s1761 = sld [smem:[#allocation4 + $0x61]]
        %v1762 = vstv %s1761
        %v1763 = vmul.f32 %v1762, %v1080
        %v1764 = vadd.f32 %v1760, %v1763
        %1766 = vrot.lane.b32.xlu0 %v1764, 32
        %v1767 = vpop.permute.xlu0 %1766
        %v1768 = vrot.slane %v1767, 1
        %v1769 = vsel %vm1163, %v1767, %v1768
        %v1771 = vadd.f32 %v1757, %v1769
        %vm1772 = vcmp.ge.s32.totalorder %v1064, 4294967293
        %vm1773 = vcmp.lt.s32.totalorder %v1064, 13
        %vm1774 = vmand %vm1772, %vm1773
        %1776 = vrot.lane.b32.xlu0 %v1771, 122
        %v1777 = vpop.permute.xlu0 %1776
        %v1778 = vrot.slane %v1777, 1
        %vm1779 = vcmask 998400
        %v1780 = vsel %vm1779, %v1777, %v1778
        %v1782 = vsel %vm1774, %v1780, 0.0
        %v1783 = vadd.f32 %v1170, %v1272
        %v1784 = vadd.f32 %v1374, %v1476
        %v1785 = vadd.f32 %v1783, %v1784
        %v1786 = vadd.f32 %v1578, %v1680
        %s1787 = sld [smem:[#allocation3]]
        %v1788 = vstv %s1787
        %v1789 = vadd.f32 %v1782, %v1788
        %v1790 = vadd.f32 %v1786, %v1789
        %v1791 = vadd.f32 %v1785, %v1790
        %v1792 = vxor.u32 %v1791, 2147483648
        %v1793 = vmul.f32 %v1792, 1.442695
        %v1794 = vpow.pop %v1793
        %v1795 = vadd.f32 %v1794, 1.0
        %v1796 = vrcp.pop %v1795
        %v1797 = vmul.f32 1.0, %v1796
        %v1799 = vlaneseq
        %v1800 = vshrl.u32 %v1799, 7
        %v1801 = vsub.s32 0, %v1800
        %v1802 = vrot.slane %v1797, %v1801
        %v1803 = vlaneseq
        %v1804 = vshrl.u32 %v1803, 7
        %v1805 = vsub.s32 1, %v1804
        %v1806 = vrot.slane %v1797, %v1805
        %v1809 = vmul.f32 %v893, %v1802
        %v1810 = vmul.f32 %v894, %v1806
        %v1811 = vmul.f32 %v895, %v1802
        %v1812 = vmul.f32 %v896, %v1806
        %v1813 = vmul.f32 %v897, %v1802
        %v1814 = vmul.f32 %v898, %v1806
        %v1815 = vmul.f32 %v899, %v1802
        %v1816 = vmul.f32 %v900, %v1806
        %v1817 = vmul.f32 %v901, %v1802
        %v1818 = vmul.f32 %v902, %v1806
        %v1819 = vmul.f32 %v903, %v1802
        %v1820 = vmul.f32 %v904, %v1806
        %v1821 = vmul.f32 %v905, %v1802
        %v1822 = vmul.f32 %v906, %v1806
        %v1823 = vmul.f32 %v907, %v1802
        %v1824 = vmul.f32 %v908, %v1806
        %v1825 = vmul.f32 %v909, %v1802
        %v1826 = vmul.f32 %v910, %v1806
        %v1827 = vmul.f32 %v911, %v1802
        %v1828 = vmul.f32 %v912, %v1806
        %v1829 = vmul.f32 %v913, %v1802
        %v1830 = vmul.f32 %v914, %v1806
        %v1831 = vmul.f32 %v915, %v1802
        %v1832 = vmul.f32 %v916, %v1806
        %v1833 = vmul.f32 %v917, %v1802
        %v1834 = vmul.f32 %v918, %v1806
        %v1835 = vmul.f32 %v919, %v1802
        %v1836 = vmul.f32 %v920, %v1806
        %v1837 = vmul.f32 %v921, %v1802
        %v1838 = vmul.f32 %v922, %v1806
        %v1839 = vmul.f32 %v923, %v1802
        %v1840 = vmul.f32 %v924, %v1806
        %1841 = vst [vmem:[%s320] sm:$0xff] %v1809
        %1842 = vst [vmem:[%s320 + $0x8] sm:$0xff] %v1810
        %1843 = vst [vmem:[%s320 + $0x10] sm:$0xff] %v1811
        %1844 = vst [vmem:[%s320 + $0x18] sm:$0xff] %v1812
        %1845 = vst [vmem:[%s320 + $0x20] sm:$0xff] %v1813
        %1846 = vst [vmem:[%s320 + $0x28] sm:$0xff] %v1814
        %1847 = vst [vmem:[%s320 + $0x30] sm:$0xff] %v1815
        %1848 = vst [vmem:[%s320 + $0x38] sm:$0xff] %v1816
        %1849 = vst [vmem:[%s320 + $0x40] sm:$0xff] %v1817
        %1850 = vst [vmem:[%s320 + $0x48] sm:$0xff] %v1818
        %1851 = vst [vmem:[%s320 + $0x50] sm:$0xff] %v1819
        %1852 = vst [vmem:[%s320 + $0x58] sm:$0xff] %v1820
        %1853 = vst [vmem:[%s320 + $0x60] sm:$0xff] %v1821
        %1854 = vst [vmem:[%s320 + $0x68] sm:$0xff] %v1822
        %1855 = vst [vmem:[%s320 + $0x70] sm:$0xff] %v1823
        %1856 = vst [vmem:[%s320 + $0x78] sm:$0xff] %v1824
        %1857 = vst [vmem:[%s320 + $0x80] sm:$0xff] %v1825
        %1858 = vst [vmem:[%s320 + $0x88] sm:$0xff] %v1826
        %1859 = vst [vmem:[%s320 + $0x90] sm:$0xff] %v1827
        %1860 = vst [vmem:[%s320 + $0x98] sm:$0xff] %v1828
        %1861 = vst [vmem:[%s320 + $0xa0] sm:$0xff] %v1829
        %1862 = vst [vmem:[%s320 + $0xa8] sm:$0xff] %v1830
        %1863 = vst [vmem:[%s320 + $0xb0] sm:$0xff] %v1831
        %1864 = vst [vmem:[%s320 + $0xb8] sm:$0xff] %v1832
        %1865 = vst [vmem:[%s320 + $0xc0] sm:$0xff] %v1833
        %1866 = vst [vmem:[%s320 + $0xc8] sm:$0xff] %v1834
        %1867 = vst [vmem:[%s320 + $0xd0] sm:$0xff] %v1835
        %1868 = vst [vmem:[%s320 + $0xd8] sm:$0xff] %v1836
        %1869 = vst [vmem:[%s320 + $0xe0] sm:$0xff] %v1837
        %1870 = vst [vmem:[%s320 + $0xe8] sm:$0xff] %v1838
        %1871 = vst [vmem:[%s320 + $0xf0] sm:$0xff] %v1839
        %1872 = vst [vmem:[%s320 + $0xf8] sm:$0xff] %v1840
        %p1873 = scmp.lt.s32.totalorder %s21, 1
        %s1874 = scalar_select %p1873, %s21, 1
        %s1875 = smul.addr %s1874, 32
        %s1876 = smul.addr %s1875, 8
        %s1877 = scalar_lea.vmem %s8, %s1876
        // Predicated region
        $region57: #{cbam_pallas.1} parent=51 // pred_check
          %p1878 = pneg %p212
        $region58: #{cbam_pallas.1} parent=51 // pred_check_branch
          %1880 = sbr.rel (%p1878) target = $region60
        $region59: #{cbam_pallas.1} parent=51 // pred_region
          _
        $region60: #{cbam_pallas.1} parent=51 // pred_fallthru
          _
      $region52: #{cbam_pallas.1} parent=5 // pred_fallthru
        _
      %p1881 = scmp.le.s32.totalorder 2, %s16
      // Predicated region
      $region61: #{cbam_pallas.1} parent=5 // pred_check
        %p1882 = pneg %p1881
      $region62: #{cbam_pallas.1} parent=5 // pred_check_branch
        %1884 = sbr.rel (%p1882) target = $region64
      $region63: #{cbam_pallas.1} parent=5 // pred_region
        %s1885 = ssub.s32 %s16, 2
        // Predicated region
        $region65: #{cbam_pallas.1} parent=63 // pred_check
          %p1886 = pneg %p218
        $region66: #{cbam_pallas.1} parent=63 // pred_check_branch
          %1888 = sbr.rel (%p1886) target = $region68
        $region67: #{cbam_pallas.1} parent=63 // pred_region
          %p1889 = scmp.lt.s32.totalorder %s22, 1
          %s1890 = scalar_select %p1889, %s22, 1
          %s1891 = smul.addr %s1890, 32
          %s1892 = smul.addr %s1891, 8
          %s1893 = scalar_lea.vmem %s8, %s1892
        $region68: #{cbam_pallas.1} parent=63 // pred_fallthru
          _
      $region64: #{cbam_pallas.1} parent=5 // pred_fallthru
        _
    $region6: #{cbam_pallas.1} parent=1 // loop_footer
      %s20 = sadd.s32 1, %s16
    $region7: #{cbam_pallas.1} parent=1 // loop_footer_branch
      %15 = sbr.rel target = $region3
    $region8: #{cbam_pallas.1} parent=1 // loop_exit
      _
    %1894 = vsyncpa [#allocation5], 1
    %s1895 = scalar_lea.sflag [#allocation5], 1
    %1896 = vsyncpa %s1895, 1

</llo_original>
